<compile_context>
chip_gen: v7x
topology: tpu7x:2x2x1
jax: 0.10.0
libtpu: 0.0.40
codegen_flags: <defaults>
</compile_context>

<pallas_src>
import math

import numpy as np
import jax
import jax.numpy as jnp
from jax.experimental import pallas as pl
from jax.experimental.pallas import tpu as pltpu

SIDE_LENGTHS = np.array([64, 64, 64, 64, 64, 64, 64, 64]).reshape(-1, 2)
# Registered `laplacian` buffer of the PyTorch module.  The boundary kernel
# uses the identity  conv2d(laplacian, zero-pad) = 9*center - 3x3 box-sum.
LAPLACIAN = np.array([-1, -1, -1, -1, 8, -1, -1, -1, -1],
                     dtype=np.float32).reshape(3, 3)


# --------------------------------------------------------------------------
# Block-size policy (per-generation)
# --------------------------------------------------------------------------
def _tc_per_device():
    """TensorCores exposed per jax device: 2 on v7x / v4 / v5p, else 1."""
    try:
        kind = jax.devices()[0].device_kind.lower()
    except Exception:
        return 2  # conservative: more grid steps
    for tag in ("7", "v4", "v5p"):
        if tag in kind:
            return 2
    return 1


def _pick_batch(n, bytes_per_item, *, min_steps,
                vmem_budget=8 << 20, candidates=(128, 64, 32, 16, 8, 4, 2)):
    """Largest per-grid-step batch with >= min_steps grid steps and a
    double-buffered VMEM footprint under `vmem_budget`."""
    for c in candidates:
        if pl.cdiv(n, c) >= min_steps and 2 * c * bytes_per_item <= vmem_budget:
            return c
    return 1


# --------------------------------------------------------------------------
# Pallas kernel 1: batched per-ROI crop_and_resize (ROIAlign as two batched
# bf16 MXU matmuls, f32 accumulation) + >= 0.5 threshold, int8 output.
# Packed variant lane-concatenates two ROIs -> 128-lane-dense output stores.
# --------------------------------------------------------------------------
def _roi_compute(wy_ref, m_ref, wx_ref):
    wy = wy_ref[...]                              # (Nb, S, H) bf16
    m = m_ref[...].astype(jnp.bfloat16)           # (Nb, H, W) int8 -> bf16
    wx = wx_ref[...]                              # (Nb, S, W) bf16
    # x-resize first: intermediate is (Nb, H, S) -> S=64 lanes (not W=28).
    tx = jnp.einsum("nhw,ntw->nht", m, wx,
                    preferred_element_type=jnp.float32)          # (Nb, H, S)
    v = jnp.einsum("nsh,nht->nst", wy, tx.astype(jnp.bfloat16),
                   preferred_element_type=jnp.float32)           # (Nb, S, S)
    return v


def _roi_kernel_packed(wy_ref, m_ref, wx_ref, o_ref):
    v = _roi_compute(wy_ref, m_ref, wx_ref)
    nb, s, _ = v.shape
    v4 = v.reshape(nb // 2, 2, s, s)              # leading-dim split: no relayout
    packed = jnp.concatenate([v4[:, 0], v4[:, 1]], axis=-1)      # (Nb/2, S, 2S)
    o_ref[...] = (packed >= 0.5).astype(jnp.int8)


def _roi_kernel(wy_ref, m_ref, wx_ref, o_ref):
    v = _roi_compute(wy_ref, m_ref, wx_ref)
    o_ref[...] = (v >= 0.5).astype(jnp.int8)


def _roi_crop_resize(wy, masks, wx):
    N, S, H = wy.shape
    W = masks.shape[-1]

    wy_b = wy.astype(jnp.bfloat16)
    wx_b = wx.astype(jnp.bfloat16)
    m_i8 = masks.astype(jnp.int8)                 # binary mask: exact in int8

    per_roi_bytes = S * H * 2 + S * W * 2 + H * W * 1 + S * S * 1
    Nb = _pick_batch(N, per_roi_bytes, min_steps=2 * _tc_per_device())
    nblk = pl.cdiv(N, Nb)                         # ragged tail handled by Pallas
    pack = (Nb % 2 == 0)

    in_specs = [
        pl.BlockSpec((Nb, S, H), lambda n: (n, 0, 0)),
        pl.BlockSpec((Nb, H, W), lambda n: (n, 0, 0)),
        pl.BlockSpec((Nb, S, W), lambda n: (n, 0, 0)),
    ]
    cparams = pltpu.CompilerParams(dimension_semantics=("parallel",))

    if pack:
        out = pl.pallas_call(
            _roi_kernel_packed,
            out_shape=jax.ShapeDtypeStruct((nblk * Nb // 2, S, 2 * S), jnp.int8),
            grid=(nblk,),
            in_specs=in_specs,
            out_specs=pl.BlockSpec((Nb // 2, S, 2 * S), lambda n: (n, 0, 0)),
            compiler_params=cparams,
        )(wy_b, m_i8, wx_b)
        # Un-pack the two-ROIs-per-row layout (int8, fuses with the bool cast).
        full = jnp.stack([out[:, :, :S], out[:, :, S:]], axis=1).reshape(-1, S, S)
    else:
        out = pl.pallas_call(
            _roi_kernel,
            out_shape=jax.ShapeDtypeStruct((nblk * Nb, S, S), jnp.int8),
            grid=(nblk,),
            in_specs=in_specs,
            out_specs=pl.BlockSpec((Nb, S, S), lambda n: (n, 0, 0)),
            compiler_params=cparams,
        )(wy_b, m_i8, wx_b)
        full = out
    return full[:N]


# --------------------------------------------------------------------------
# Glue: per-ROI separable ROIAlign interpolation matrices
# (mirrors torchvision ROIAlign, aligned=True, sampling_ratio=0).
# TODO(synk): replace the one_hot builder with scatter/segment-sum (or build
# rows in-kernel from scalar-prefetched boxes) for production canvas sizes.
# --------------------------------------------------------------------------
def _axis_weights(start, length, size_in, size_out, max_grid):
    bin_size = length / size_out
    grid = jnp.where(length > 0, jnp.ceil(length / size_out), 0.0).astype(jnp.int32)
    grid = jnp.clip(grid, 0, max_grid)
    grid_f = jnp.maximum(grid, 1).astype(jnp.float32)

    p = jnp.arange(size_out, dtype=jnp.float32)[:, None]          # (S, 1)
    ii = jnp.arange(max_grid)[None, :]                            # (1, G)
    coords = start + p * bin_size + (ii.astype(jnp.float32) + 0.5) * bin_size / grid_f

    valid = ii < grid                                             # (1, G)
    in_range = (coords >= -1.0) & (coords <= size_in)             # (S, G)

    c = jnp.maximum(coords, 0.0)
    low0 = jnp.floor(c).astype(jnp.int32)
    at_edge = low0 >= size_in - 1
    low = jnp.where(at_edge, size_in - 1, low0)
    high = jnp.where(at_edge, size_in - 1, low0 + 1)
    c = jnp.where(at_edge, jnp.float32(size_in - 1), c)
    l = c - low.astype(jnp.float32)
    h = 1.0 - l

    w = (h[..., None] * jax.nn.one_hot(low, size_in, dtype=jnp.float32)
         + l[..., None] * jax.nn.one_hot(high, size_in, dtype=jnp.float32))
    w = w * (in_range & valid).astype(jnp.float32)[..., None]
    return w.sum(axis=1) / grid_f                                 # (S, size_in)


def _build_roi_weights(boxes, in_h, in_w, out_size, max_grid):
    boxes = jnp.asarray(boxes, jnp.float32)
    x1, y1, x2, y2 = (boxes[:, i] for i in range(4))
    fy = jax.vmap(lambda s, l: _axis_weights(s, l, in_h, out_size, max_grid))
    fx = jax.vmap(lambda s, l: _axis_weights(s, l, in_w, out_size, max_grid))
    wy = fy(y1 - 0.5, y2 - y1)     # (N, S, H)
    wx = fx(x1 - 0.5, x2 - x1)     # (N, S, W)
    return wy, wx


# --------------------------------------------------------------------------
# ClippingStrategy.forward equivalent
# --------------------------------------------------------------------------
def clipping_strategy_forward(instance_masks, clip_boxes=None, lid=0):
    """instance_masks: list (one per image) of (Ni, H, W) float32 bitmasks
       clip_boxes: (sum Ni, 4) xyxy float32 boxes
       returns: bool (N_total, S, S) with S = side_lengths[lid][0]."""
    if clip_boxes is None:
        # TODO(synk): rasterize_no_crop branch needs detectron2 polygon
        # rasterization; no Pallas equivalent here.
        raise NotImplementedError
    side = int(SIDE_LENGTHS[lid][0])
    kept = [m for m in instance_masks if m.shape[0] > 0]   # skip empty images
    masks = jnp.concatenate(kept, axis=0).astype(jnp.float32)
    N, H, W = masks.shape
    max_grid = max(1, math.ceil(max(H, W) / side)) + 1
    wy, wx = _build_roi_weights(clip_boxes, H, W, side, max_grid)
    out = _roi_crop_resize(wy, masks, wx)
    return out.astype(bool)


# --------------------------------------------------------------------------
# Pallas kernel 2: _extract_target_boundary (3x3 Laplacian with zero padding,
# clamp, threshold).  Zero-padded conv == 9*center - 3x3 box-sum; the box-sum
# is separable: two bf16 banded matmuls against VMEM-resident tridiagonal
# matrices (DMA'd once via a constant index_map).  {0,1} data and small-int
# sums are exact in bf16, so the result matches f32 bit-for-bit.
# clamp(min=0) followed by ">0.1" is just ">0.1", so the clamp is folded away.
# --------------------------------------------------------------------------
def _boundary_kernel(m_ref, th_ref, tw_ref, o_ref):
    m = m_ref[...]                                     # (Bb, H, W) bf16
    th = th_ref[...]                                   # (Bb, H, H) bf16, resident
    tw = tw_ref[...]                                   # (Bb, W, W) bf16, resident
    vert = jnp.einsum("bik,bkw->biw", th, m,
                      preferred_element_type=jnp.float32)        # vertical 3-sum
    box = jnp.einsum("biw,bvw->biv", vert.astype(jnp.bfloat16), tw,
                     preferred_element_type=jnp.float32)         # 3x3 box-sum
    lap = 9.0 * m.astype(jnp.float32) - box                      # Laplacian conv
    o_ref[...] = (lap > 0.1).astype(jnp.int8)


def extract_target_boundary(masks, shape=None):
    """masks: (B, H, W) float32 -> (B, 1, H, W) float32 (NCHW like PyTorch)."""
    B, H, W = masks.shape
    m_b = masks.astype(jnp.bfloat16)                   # {0,1}: exact in bf16

    per_item = H * W * (2 + 1)                         # bf16 in + int8 out
    Bb = _pick_batch(B, per_item, min_steps=2 * _tc_per_device())
    nblk = pl.cdiv(B, Bb)

    ih = np.arange(H)
    iw = np.arange(W)
    th = jnp.asarray((np.abs(ih[:, None] - ih[None, :]) <= 1), jnp.bfloat16)
    tw = jnp.asarray((np.abs(iw[:, None] - iw[None, :]) <= 1), jnp.bfloat16)
    th_b = jnp.broadcast_to(th[None], (Bb, H, H))      # tiny, built once on host
    tw_b = jnp.broadcast_to(tw[None], (Bb, W, W))

    out = pl.pallas_call(
        _boundary_kernel,
        out_shape=jax.ShapeDtypeStruct((nblk * Bb, H, W), jnp.int8),
        grid=(nblk,),
        in_specs=[
            pl.BlockSpec((Bb, H, W), lambda i: (i, 0, 0)),
            pl.BlockSpec((Bb, H, H), lambda i: (0, 0, 0)),   # DMA'd once, resident
            pl.BlockSpec((Bb, W, W), lambda i: (0, 0, 0)),   # DMA'd once, resident
        ],
        out_specs=pl.BlockSpec((Bb, H, W), lambda i: (i, 0, 0)),
        compiler_params=pltpu.CompilerParams(dimension_semantics=("parallel",)),
    )(m_b, th_b, tw_b)

    out = out[:B].astype(jnp.float32)[:, None, :, :]
    if shape is not None and (H, W) != tuple(shape):
        # NOTE: PyTorch uses F.interpolate(mode='nearest'); pixel-center
        # conventions can differ for non-integer scale factors.
        out = jax.image.resize(out, (B, 1) + tuple(shape), method="nearest")
    return out


# --------------------------------------------------------------------------
if __name__ == "__main__":
    key = jax.random.PRNGKey(0)
    k1, k2, k3 = jax.random.split(key, 3)

    H = W = 28                      # bitmask canvas size per instance
    n_per_image = [6, 0, 5, 5]      # one empty image (skipped, like PyTorch)
    N = sum(n_per_image)            # 16
    S = int(SIDE_LENGTHS[0][0])     # 64

    masks_all = (jax.random.uniform(k1, (N, H, W)) > 0.5).astype(jnp.float32)
    instance_masks, off = [], 0
    for n in n_per_image:
        instance_masks.append(masks_all[off:off + n])
        off += n

    # random xyxy boxes inside the canvas
    cxy = jax.random.uniform(k2, (N, 2), minval=6.0, maxval=float(H - 6))
    half = jax.random.uniform(k3, (N, 2), minval=3.0, maxval=6.0)
    boxes = jnp.concatenate([cxy - half, cxy + half], axis=1)

    out = clipping_strategy_forward(instance_masks, boxes, lid=0)
    out = jax.block_until_ready(out)
    assert out.shape == (N, S, S) and out.dtype == jnp.bool_

    # pure-JAX reference mirroring the kernel's bf16-operand / f32-accum /
    # x-first path (products and partial sums stay exact in f32, so this
    # should match bit-for-bit).
    max_grid = max(1, math.ceil(max(H, W) / S)) + 1
    wy, wx = _build_roi_weights(boxes, H, W, S, max_grid)
    wy_b, wx_b = wy.astype(jnp.bfloat16), wx.astype(jnp.bfloat16)
    m_b = masks_all.astype(jnp.int8).astype(jnp.bfloat16)
    tx_ref = jnp.einsum("nhw,ntw->nht", m_b, wx_b,
                        preferred_element_type=jnp.float32)
    v_ref = jnp.einsum("nsh,nht->nst", wy_b, tx_ref.astype(jnp.bfloat16),
                       preferred_element_type=jnp.float32)
    ref = v_ref >= 0.5
    mismatch = float(jnp.mean(out != ref))
    assert mismatch < 1e-2, f"mismatch vs bf16-path reference: {mismatch}"

    # loose sanity check against the full-f32 ROIAlign reference (bf16 weight
    # rounding may legitimately flip values sitting very close to 0.5)
    ref_f32 = jnp.einsum("nsh,nhw,ntw->nst", wy, masks_all, wx) >= 0.5
    loose = float(jnp.mean(out != ref_f32))
    assert loose < 8e-2, f"mismatch vs f32 reference: {loose}"

    # boundary helper (registered `laplacian` buffer): compare with a plain
    # JAX padded 9-tap convolution (integer-exact, so mismatch must be ~0)
    b = extract_target_boundary(masks_all, (H, W))
    b = jax.block_until_ready(b)
    assert b.shape == (N, 1, H, W)
    padded = jnp.pad(masks_all, ((0, 0), (1, 1), (1, 1)))
    lap = sum(float(LAPLACIAN[dy, dx]) * padded[:, dy:dy + H, dx:dx + W]
              for dy in range(3) for dx in range(3))
    b_ref = (jnp.maximum(lap, 0.0) > 0.1).astype(jnp.float32)[:, None]
    bmis = float(jnp.mean(jnp.abs(b - b_ref)))
    assert bmis < 1e-3, f"boundary mismatch: {bmis}"

    print("KERNEL_OK")
</pallas_src>

<mosaic_0001>
module attributes {stable_mosaic.version = 11 : i64} {
  func.func @_roi_kernel_packed(%arg0: i32, %arg1: memref<8x64x28xbf16, #tpu.memory_space<vmem>>, %arg2: memref<8x28x28xi8, #tpu.memory_space<vmem>>, %arg3: memref<8x64x28xbf16, #tpu.memory_space<vmem>>, %arg4: memref<4x64x128xi8, #tpu.memory_space<vmem>>) attributes {dimension_semantics = [#tpu.dimension_semantics<parallel>], iteration_bounds = array<i64: 2>, scalar_prefetch = 0 : i64, scratch_operands = 0 : i64, tpu.core_type = #tpu.core_type<tc>, window_params = [{transform_indices = @transform_0, window_bounds = array<i64: 8, 64, 28>}, {transform_indices = @transform_1, window_bounds = array<i64: 8, 28, 28>}, {transform_indices = @transform_2, window_bounds = array<i64: 8, 64, 28>}, {transform_indices = @transform_3, window_bounds = array<i64: 4, 64, 128>}]} {
    %c0 = arith.constant 0 : index
    %c0_0 = arith.constant 0 : index
    %c0_1 = arith.constant 0 : index
    %0 = vector.load %arg1[%c0, %c0_0, %c0_1] : memref<8x64x28xbf16, #tpu.memory_space<vmem>>, vector<8x64x28xbf16>
    %c0_2 = arith.constant 0 : index
    %c0_3 = arith.constant 0 : index
    %c0_4 = arith.constant 0 : index
    %1 = vector.load %arg2[%c0_2, %c0_3, %c0_4] : memref<8x28x28xi8, #tpu.memory_space<vmem>>, vector<8x28x28xi8>
    %2 = arith.sitofp %1 : vector<8x28x28xi8> to vector<8x28x28xbf16>
    %c0_5 = arith.constant 0 : index
    %c0_6 = arith.constant 0 : index
    %c0_7 = arith.constant 0 : index
    %3 = vector.load %arg3[%c0_5, %c0_6, %c0_7] : memref<8x64x28xbf16, #tpu.memory_space<vmem>>, vector<8x64x28xbf16>
    "tpu.trace_start"() <{level = 10 : i32, message = "nhw,ntw->nht"}> : () -> ()
    %cst = arith.constant dense<0.000000e+00> : vector<8x28x64xf32>
    %4 = tpu.matmul %2, %3, %cst {dimension_numbers = #tpu.dot_dimension_numbers<[2], [2], [1], [1], [0, 0, 0, 1, 1, 1], [0], [0]>} : vector<8x28x28xbf16>, vector<8x64x28xbf16>, vector<8x28x64xf32> -> vector<8x28x64xf32>
    "tpu.trace_stop"() : () -> ()
    %5 = arith.truncf %4 : vector<8x28x64xf32> to vector<8x28x64xbf16>
    "tpu.trace_start"() <{level = 10 : i32, message = "nsh,nht->nst"}> : () -> ()
    %cst_8 = arith.constant dense<0.000000e+00> : vector<8x64x64xf32>
    %6 = tpu.matmul %0, %5, %cst_8 {dimension_numbers = #tpu.dot_dimension_numbers<[2], [1], [1], [2], [0, 0, 0, 1, 1, 2], [0], [0]>} : vector<8x64x28xbf16>, vector<8x28x64xbf16>, vector<8x64x64xf32> -> vector<8x64x64xf32>
    "tpu.trace_stop"() : () -> ()
    %7 = vector.shape_cast %6 : vector<8x64x64xf32> to vector<4x2x64x64xf32>
    %8 = vector.extract_strided_slice %7 {offsets = [0, 0, 0, 0], sizes = [4, 1, 64, 64], strides = [1, 1, 1, 1]} : vector<4x2x64x64xf32> to vector<4x1x64x64xf32>
    %9 = vector.shape_cast %8 : vector<4x1x64x64xf32> to vector<4x64x64xf32>
    %10 = vector.extract_strided_slice %7 {offsets = [0, 1, 0, 0], sizes = [4, 1, 64, 64], strides = [1, 1, 1, 1]} : vector<4x2x64x64xf32> to vector<4x1x64x64xf32>
    %11 = vector.shape_cast %10 : vector<4x1x64x64xf32> to vector<4x64x64xf32>
    %12 = tpu.concatenate %9, %11 in 2 : vector<4x64x64xf32>, vector<4x64x64xf32> -> vector<4x64x128xf32>
    %cst_9 = arith.constant 5.000000e-01 : f32
    %13 = vector.broadcast %cst_9 : f32 to vector<4x64x128xf32>
    %14 = arith.cmpf oge, %12, %13 : vector<4x64x128xf32>
    %15 = arith.extui %14 : vector<4x64x128xi1> to vector<4x64x128xi8>
    %c0_10 = arith.constant 0 : index
    %c0_11 = arith.constant 0 : index
    %c0_12 = arith.constant 0 : index
    %16 = vector.load %arg4[%c0_10, %c0_11, %c0_12] : memref<4x64x128xi8, #tpu.memory_space<vmem>>, vector<4x64x128xi8>
    tpu.vector_store %arg4[%c0_10, %c0_11, %c0_12], %15 {strides = array<i32>} : memref<4x64x128xi8, #tpu.memory_space<vmem>>, vector<4x64x128xi8>,
    return
  }
  func.func @transform_0(%arg0: i32) -> (i32, i32, i32) {
    %c0_i32 = arith.constant 0 : i32
    %c0_i32_0 = arith.constant 0 : i32
    %c0_i32_1 = arith.constant 0 : i32
    return %arg0, %c0_i32, %c0_i32_0 : i32, i32, i32
  }
  func.func @transform_1(%arg0: i32) -> (i32, i32, i32) {
    %c0_i32 = arith.constant 0 : i32
    %c0_i32_0 = arith.constant 0 : i32
    %c0_i32_1 = arith.constant 0 : i32
    return %arg0, %c0_i32, %c0_i32_0 : i32, i32, i32
  }
  func.func @transform_2(%arg0: i32) -> (i32, i32, i32) {
    %c0_i32 = arith.constant 0 : i32
    %c0_i32_0 = arith.constant 0 : i32
    %c0_i32_1 = arith.constant 0 : i32
    return %arg0, %c0_i32, %c0_i32_0 : i32, i32, i32
  }
  func.func @transform_3(%arg0: i32) -> (i32, i32, i32) {
    %c0_i32 = arith.constant 0 : i32
    %c0_i32_0 = arith.constant 0 : i32
    %c0_i32_1 = arith.constant 0 : i32
    return %arg0, %c0_i32, %c0_i32_0 : i32, i32, i32
  }
}

</mosaic_0001>

<llo_original>
// kernel: tpu_custom_call.1
$region0: #{tpu_custom_call.1}
  #allocation0 [shape = 'u32[]', space=smem, size = 0x4, offset = 0x4, fixed_abs, tag = 'smem constant byte address 0x4 - core index']
  #allocation1 [shape = 'u32[144,128]{1,0:T(1,128)}', space=vmem, size = 0x12000, scoped, tag = 'internal scratch']
  %s0 = inlined_call_operand.vmem [shape: bf16[16,64,28], index: 0, kind: input, shape index: {}]
  %s1 = inlined_call_operand.vmem [shape: s8[16,28,28], index: 1, kind: input, shape index: {}]
  %s2 = inlined_call_operand.vmem [shape: bf16[16,64,28], index: 2, kind: input, shape index: {}]
  %s3 = inlined_call_operand.hbm [shape: s8[8,64,128], index: 3, kind: output, shape index: {}]
  %s4 = sld [smem:[#allocation0]]
  $region45: #{tpu_custom_call.1} parent=0
    _
  %s6 = ssub.s32 1, %s4
  %s7 = scalar_select 0, %s6, %s4
  $region1: #{tpu_custom_call.1} parent=0
    #allocation2 [shape = 'u8[65536]{0}', space=vmem, size = 0x10000, scoped, tag = 'output window, operand 0']
    #allocation3 [shape = 's32[2]{0}', space=sflag, size = 0x8, scoped, tag = 'scoped memory for tpu_custom_call.1']
    %8 = vsyncpa [#allocation3], 0
    %s9 = scalar_lea.sflag [#allocation3], 1
    %10 = vsyncpa %s9, 0
    loop: start=0, step=1, limit=4
    $region2: #{tpu_custom_call.1} parent=1 // loop_pre_header
      _
    $region3: #{tpu_custom_call.1} parent=1 // loop_header
      %s12 = sphi 0, %s16
      %p13 = scmp.ge.s32.totalorder %s12, 4
      %s22 = sphi 0, %s24
      %s25 = sphi 0, %s22
      %s26 = sphi 0, %s25
      %s42 = sphi 0, %s26
      %s48 = sphi 0, %s50
      %s51 = sphi 0, %s48
      %s52 = sphi 0, %s51
      %s68 = sphi 0, %s52
      %s74 = sphi 0, %s76
      %s77 = sphi 0, %s74
      %s78 = sphi 0, %s77
      %s94 = sphi 0, %s78
      %s100 = sphi 0, %s102
      %s103 = sphi 0, %s100
      %s104 = sphi 0, %s103
      %s120 = sphi 0, %s104
    $region4: #{tpu_custom_call.1} parent=1 // loop_header_branch
      %15 = sbr.rel (%p13) target = $region8
    $region5: #{tpu_custom_call.1} parent=1 // loop_body
      %s17 = ssub.s32 %s12, 1
      %s18 = ssub.s32 %s12, 2
      %s19 = sadd.s32 %s12, 1
      %s20 = ssub.s32 %s12, %s19
      %p21 = scmp.eq.s32.totalorder %s20, 0
      %s23 = sadd.s32 %s22, 1
      %s24 = scalar_select %p21, %s22, %s23
      %p27 = pneg %p21
      %p28 = scmp.eq.s32.totalorder %s12, 1
      %p29 = por %p27, %p28
      %p30 = scmp.ne.s32.totalorder %s22, %s25
      %p31 = scmp.eq.s32.totalorder %s12, 0
      %p32 = por %p30, %p31
      %p33 = scmp.ne.s32.totalorder %s22, %s25
      %p34 = scmp.eq.s32.totalorder %s17, 1
      %p35 = por %p33, %p34
      %p36 = scmp.ne.s32.totalorder %s25, %s26
      %p37 = scmp.eq.s32.totalorder %s17, 0
      %p38 = por %p36, %p37
      %p39 = scmp.ne.s32.totalorder %s25, %s26
      %p40 = scmp.eq.s32.totalorder %s18, 1
      %p41 = por %p39, %p40
      %p43 = scmp.ne.s32.totalorder %s26, %s42
      %p44 = scmp.eq.s32.totalorder %s18, 0
      %p45 = por %p43, %p44
      %s46 = ssub.s32 %s12, %s19
      %p47 = scmp.eq.s32.totalorder %s46, 0
      %s49 = sadd.s32 %s48, 1
      %s50 = scalar_select %p47, %s48, %s49
      %p53 = pneg %p47
      %p54 = scmp.eq.s32.totalorder %s12, 1
      %p55 = por %p53, %p54
      %p56 = scmp.ne.s32.totalorder %s48, %s51
      %p57 = scmp.eq.s32.totalorder %s12, 0
      %p58 = por %p56, %p57
      %p59 = scmp.ne.s32.totalorder %s48, %s51
      %p60 = scmp.eq.s32.totalorder %s17, 1
      %p61 = por %p59, %p60
      %p62 = scmp.ne.s32.totalorder %s51, %s52
      %p63 = scmp.eq.s32.totalorder %s17, 0
      %p64 = por %p62, %p63
      %p65 = scmp.ne.s32.totalorder %s51, %s52
      %p66 = scmp.eq.s32.totalorder %s18, 1
      %p67 = por %p65, %p66
      %p69 = scmp.ne.s32.totalorder %s52, %s68
      %p70 = scmp.eq.s32.totalorder %s18, 0
      %p71 = por %p69, %p70
      %s72 = ssub.s32 %s12, %s19
      %p73 = scmp.eq.s32.totalorder %s72, 0
      %s75 = sadd.s32 %s74, 1
      %s76 = scalar_select %p73, %s74, %s75
      %p79 = pneg %p73
      %p80 = scmp.eq.s32.totalorder %s12, 1
      %p81 = por %p79, %p80
      %p82 = scmp.ne.s32.totalorder %s74, %s77
      %p83 = scmp.eq.s32.totalorder %s12, 0
      %p84 = por %p82, %p83
      %p85 = scmp.ne.s32.totalorder %s74, %s77
      %p86 = scmp.eq.s32.totalorder %s17, 1
      %p87 = por %p85, %p86
      %p88 = scmp.ne.s32.totalorder %s77, %s78
      %p89 = scmp.eq.s32.totalorder %s17, 0
      %p90 = por %p88, %p89
      %p91 = scmp.ne.s32.totalorder %s77, %s78
      %p92 = scmp.eq.s32.totalorder %s18, 1
      %p93 = por %p91, %p92
      %p95 = scmp.ne.s32.totalorder %s78, %s94
      %p96 = scmp.eq.s32.totalorder %s18, 0
      %p97 = por %p95, %p96
      %s98 = ssub.s32 %s12, %s19
      %p99 = scmp.eq.s32.totalorder %s98, 0
      %s101 = sadd.s32 %s100, 1
      %s102 = scalar_select %p99, %s100, %s101
      %p105 = pneg %p99
      %p106 = scmp.eq.s32.totalorder %s12, 1
      %p107 = por %p105, %p106
      %p108 = scmp.ne.s32.totalorder %s100, %s103
      %p109 = scmp.eq.s32.totalorder %s12, 0
      %p110 = por %p108, %p109
      %p111 = scmp.ne.s32.totalorder %s100, %s103
      %p112 = scmp.eq.s32.totalorder %s17, 1
      %p113 = por %p111, %p112
      %p114 = scmp.ne.s32.totalorder %s103, %s104
      %p115 = scmp.eq.s32.totalorder %s17, 0
      %p116 = por %p114, %p115
      %p117 = scmp.ne.s32.totalorder %s103, %s104
      %p118 = scmp.eq.s32.totalorder %s18, 1
      %p119 = por %p117, %p118
      %p121 = scmp.ne.s32.totalorder %s104, %s120
      %p122 = scmp.eq.s32.totalorder %s18, 0
      %p123 = por %p121, %p122
      %p124 = scmp.le.s32.totalorder 1, %s12
      %p125 = scmp.lt.s32.totalorder %s12, 3
      %p126 = pnand %p124, %p125
      %p127 = pneg %p126
      // Predicated region
      $region9: #{tpu_custom_call.1} parent=5 // pred_check
        _
      $region10: #{tpu_custom_call.1} parent=5 // pred_check_branch
        %129 = sbr.rel (%p126) target = $region12
      $region11: #{tpu_custom_call.1} parent=5 // pred_region
        %s130 = ssub.s32 %s12, 1
      $region12: #{tpu_custom_call.1} parent=5 // pred_fallthru
        _
      %p131 = scmp.lt.s32.totalorder %s12, 2
      // Predicated region
      $region13: #{tpu_custom_call.1} parent=5 // pred_check
        %p132 = pneg %p131
      $region14: #{tpu_custom_call.1} parent=5 // pred_check_branch
        %134 = sbr.rel (%p132) target = $region16
      $region15: #{tpu_custom_call.1} parent=5 // pred_region
        // Predicated region
        $region17: #{tpu_custom_call.1} parent=15 // pred_check
          %p135 = pneg %p32
        $region18: #{tpu_custom_call.1} parent=15 // pred_check_branch
          %137 = sbr.rel (%p135) target = $region20
        $region19: #{tpu_custom_call.1} parent=15 // pred_region
          %s138 = smul.u32 8, %s12
          %p139 = scmp.lt.s32.totalorder %s138, 15
          %s140 = scalar_select %p139, %s138, 15
          %s141 = smul.addr %s140, 8
          %s142 = smul.addr %s141, 4
          %s143 = scalar_lea.vmem %s0, %s142
          %s144 = smul.u32 8, %s12
        $region20: #{tpu_custom_call.1} parent=15 // pred_fallthru
          _
        // Predicated region
        $region21: #{tpu_custom_call.1} parent=15 // pred_check
          %p145 = pneg %p58
        $region22: #{tpu_custom_call.1} parent=15 // pred_check_branch
          %147 = sbr.rel (%p145) target = $region24
        $region23: #{tpu_custom_call.1} parent=15 // pred_region
          %s148 = smul.u32 8, %s12
          %p149 = scmp.lt.s32.totalorder %s148, 15
          %s150 = scalar_select %p149, %s148, 15
          %s151 = smul.addr %s150, 4
          %s152 = smul.addr %s151, 2
          %s153 = scalar_lea.vmem %s1, %s152
          %s154 = smul.u32 8, %s12
        $region24: #{tpu_custom_call.1} parent=15 // pred_fallthru
          _
        // Predicated region
        $region25: #{tpu_custom_call.1} parent=15 // pred_check
          %p155 = pneg %p84
        $region26: #{tpu_custom_call.1} parent=15 // pred_check_branch
          %157 = sbr.rel (%p155) target = $region28
        $region27: #{tpu_custom_call.1} parent=15 // pred_region
          %s158 = smul.u32 8, %s12
          %p159 = scmp.lt.s32.totalorder %s158, 15
          %s160 = scalar_select %p159, %s158, 15
          %s161 = smul.addr %s160, 8
          %s162 = smul.addr %s161, 4
          %s163 = scalar_lea.vmem %s2, %s162
          %s164 = smul.u32 8, %s12
        $region28: #{tpu_custom_call.1} parent=15 // pred_fallthru
          _
      $region16: #{tpu_custom_call.1} parent=5 // pred_fallthru
        _
      %p165 = scmp.le.s32.totalorder 1, %s12
      %p166 = scmp.lt.s32.totalorder %s12, 3
      %p167 = pnand %p165, %p166
      %p168 = pneg %p167
      // Predicated region
      $region29: #{tpu_custom_call.1} parent=5 // pred_check
        _
      $region30: #{tpu_custom_call.1} parent=5 // pred_check_branch
        %170 = sbr.rel (%p167) target = $region32
      $region31: #{tpu_custom_call.1} parent=5 // pred_region
        %s171 = ssub.s32 %s12, 1
        %s172 = smul.u32 8, %s17
        %p173 = scmp.lt.s32.totalorder %s172, 15
        %s174 = scalar_select %p173, %s172, 15
        %s175 = smul.addr %s174, 8
        %s176 = smul.addr %s175, 4
        %s177 = scalar_lea.vmem %s0, %s176
        %p178 = pneg %p38
        %p179 = pneg %p35
        %s180 = smul.u32 8, %s17
        %p181 = scmp.lt.s32.totalorder %s180, 15
        %s182 = scalar_select %p181, %s180, 15
        %s183 = smul.addr %s182, 4
        %s184 = smul.addr %s183, 2
        %s185 = scalar_lea.vmem %s1, %s184
        %p186 = pneg %p64
        %p187 = pneg %p61
        %s188 = smul.u32 8, %s17
        %p189 = scmp.lt.s32.totalorder %s188, 15
        %s190 = scalar_select %p189, %s188, 15
        %s191 = smul.addr %s190, 8
        %s192 = smul.addr %s191, 4
        %s193 = scalar_lea.vmem %s2, %s192
        %p194 = pneg %p90
        %p195 = pneg %p87
        %p196 = pneg %p116
        %p197 = pneg %p113
        %s198 = sand.u32 %s103, 1
        %s199 = scalar_lea.sflag [#allocation3], %s198
        %s200 = sand.u32 %s103, 1
        %s201 = smul.addr %s200, 64
        %s202 = scalar_lea.vmem [#allocation2], %s201
        %s203 = smul.u32 8, %s17
        %p204 = scmp.lt.s32.totalorder %s203, 15
        %s205 = scalar_select %p204, %s203, 15
        %s206 = smul.addr %s205, 8
        %s207 = smul.addr %s206, 4
        %s208 = scalar_lea.vmem %s0, %s207
        %s209 = smul.u32 8, %s17
        %s210 = smul.u32 8, %s17
        %p211 = scmp.lt.s32.totalorder %s210, 15
        %s212 = scalar_select %p211, %s210, 15
        %s213 = smul.addr %s212, 4
        %s214 = smul.addr %s213, 2
        %s215 = scalar_lea.vmem %s1, %s214
        %s216 = smul.u32 8, %s17
        %s217 = smul.u32 8, %s17
        %p218 = scmp.lt.s32.totalorder %s217, 15
        %s219 = scalar_select %p218, %s217, 15
        %s220 = smul.addr %s219, 8
        %s221 = smul.addr %s220, 4
        %s222 = scalar_lea.vmem %s2, %s221
        %s223 = smul.u32 8, %s17
        %s224 = smul.u32 4, %s17
        %v228 = vld [vmem:[%s208] sm:$0xf]
        %v229 = vld [vmem:[%s208 + $0x4] sm:$0xf]
        %v230 = vld [vmem:[%s208 + $0x8] sm:$0xf]
        %v231 = vld [vmem:[%s208 + $0xc] sm:$0xf]
        %v232 = vld [vmem:[%s208 + $0x10] sm:$0xf]
        %v233 = vld [vmem:[%s208 + $0x14] sm:$0xf]
        %v234 = vld [vmem:[%s208 + $0x18] sm:$0xf]
        %v235 = vld [vmem:[%s208 + $0x1c] sm:$0xf]
        %v236 = vld [vmem:[%s208 + $0x20] sm:$0xf]
        %v237 = vld [vmem:[%s208 + $0x24] sm:$0xf]
        %v238 = vld [vmem:[%s208 + $0x28] sm:$0xf]
        %v239 = vld [vmem:[%s208 + $0x2c] sm:$0xf]
        %v240 = vld [vmem:[%s208 + $0x30] sm:$0xf]
        %v241 = vld [vmem:[%s208 + $0x34] sm:$0xf]
        %v242 = vld [vmem:[%s208 + $0x38] sm:$0xf]
        %v243 = vld [vmem:[%s208 + $0x3c] sm:$0xf]
        %v244 = vld [vmem:[%s208 + $0x40] sm:$0xf]
        %v245 = vld [vmem:[%s208 + $0x44] sm:$0xf]
        %v246 = vld [vmem:[%s208 + $0x48] sm:$0xf]
        %v247 = vld [vmem:[%s208 + $0x4c] sm:$0xf]
        %v248 = vld [vmem:[%s208 + $0x50] sm:$0xf]
        %v249 = vld [vmem:[%s208 + $0x54] sm:$0xf]
        %v250 = vld [vmem:[%s208 + $0x58] sm:$0xf]
        %v251 = vld [vmem:[%s208 + $0x5c] sm:$0xf]
        %v252 = vld [vmem:[%s208 + $0x60] sm:$0xf]
        %v253 = vld [vmem:[%s208 + $0x64] sm:$0xf]
        %v254 = vld [vmem:[%s208 + $0x68] sm:$0xf]
        %v255 = vld [vmem:[%s208 + $0x6c] sm:$0xf]
        %v256 = vld [vmem:[%s208 + $0x70] sm:$0xf]
        %v257 = vld [vmem:[%s208 + $0x74] sm:$0xf]
        %v258 = vld [vmem:[%s208 + $0x78] sm:$0xf]
        %v259 = vld [vmem:[%s208 + $0x7c] sm:$0xf]
        %v260 = vld [vmem:[%s208 + $0x80] sm:$0xf]
        %v261 = vld [vmem:[%s208 + $0x84] sm:$0xf]
        %v262 = vld [vmem:[%s208 + $0x88] sm:$0xf]
        %v263 = vld [vmem:[%s208 + $0x8c] sm:$0xf]
        %v264 = vld [vmem:[%s208 + $0x90] sm:$0xf]
        %v265 = vld [vmem:[%s208 + $0x94] sm:$0xf]
        %v266 = vld [vmem:[%s208 + $0x98] sm:$0xf]
        %v267 = vld [vmem:[%s208 + $0x9c] sm:$0xf]
        %v268 = vld [vmem:[%s208 + $0xa0] sm:$0xf]
        %v269 = vld [vmem:[%s208 + $0xa4] sm:$0xf]
        %v270 = vld [vmem:[%s208 + $0xa8] sm:$0xf]
        %v271 = vld [vmem:[%s208 + $0xac] sm:$0xf]
        %v272 = vld [vmem:[%s208 + $0xb0] sm:$0xf]
        %v273 = vld [vmem:[%s208 + $0xb4] sm:$0xf]
        %v274 = vld [vmem:[%s208 + $0xb8] sm:$0xf]
        %v275 = vld [vmem:[%s208 + $0xbc] sm:$0xf]
        %v276 = vld [vmem:[%s208 + $0xc0] sm:$0xf]
        %v277 = vld [vmem:[%s208 + $0xc4] sm:$0xf]
        %v278 = vld [vmem:[%s208 + $0xc8] sm:$0xf]
        %v279 = vld [vmem:[%s208 + $0xcc] sm:$0xf]
        %v280 = vld [vmem:[%s208 + $0xd0] sm:$0xf]
        %v281 = vld [vmem:[%s208 + $0xd4] sm:$0xf]
        %v282 = vld [vmem:[%s208 + $0xd8] sm:$0xf]
        %v283 = vld [vmem:[%s208 + $0xdc] sm:$0xf]
        %v284 = vld [vmem:[%s208 + $0xe0] sm:$0xf]
        %v285 = vld [vmem:[%s208 + $0xe4] sm:$0xf]
        %v286 = vld [vmem:[%s208 + $0xe8] sm:$0xf]
        %v287 = vld [vmem:[%s208 + $0xec] sm:$0xf]
        %v288 = vld [vmem:[%s208 + $0xf0] sm:$0xf]
        %v289 = vld [vmem:[%s208 + $0xf4] sm:$0xf]
        %v290 = vld [vmem:[%s208 + $0xf8] sm:$0xf]
        %v291 = vld [vmem:[%s208 + $0xfc] sm:$0xf]
        %v292 = vld [vmem:[%s215] sm:$0x3]
        %v293 = vld [vmem:[%s215 + $0x2] sm:$0x3]
        %v294 = vld [vmem:[%s215 + $0x4] sm:$0x3]
        %v295 = vld [vmem:[%s215 + $0x6] sm:$0x1]
        %v296 = vld [vmem:[%s215 + $0x8] sm:$0x3]
        %v297 = vld [vmem:[%s215 + $0xa] sm:$0x3]
        %v298 = vld [vmem:[%s215 + $0xc] sm:$0x3]
        %v299 = vld [vmem:[%s215 + $0xe] sm:$0x1]
        %v300 = vld [vmem:[%s215 + $0x10] sm:$0x3]
        %v301 = vld [vmem:[%s215 + $0x12] sm:$0x3]
        %v302 = vld [vmem:[%s215 + $0x14] sm:$0x3]
        %v303 = vld [vmem:[%s215 + $0x16] sm:$0x1]
        %v304 = vld [vmem:[%s215 + $0x18] sm:$0x3]
        %v305 = vld [vmem:[%s215 + $0x1a] sm:$0x3]
        %v306 = vld [vmem:[%s215 + $0x1c] sm:$0x3]
        %v307 = vld [vmem:[%s215 + $0x1e] sm:$0x1]
        %v308 = vld [vmem:[%s215 + $0x20] sm:$0x3]
        %v309 = vld [vmem:[%s215 + $0x22] sm:$0x3]
        %v310 = vld [vmem:[%s215 + $0x24] sm:$0x3]
        %v311 = vld [vmem:[%s215 + $0x26] sm:$0x1]
        %v312 = vld [vmem:[%s215 + $0x28] sm:$0x3]
        %v313 = vld [vmem:[%s215 + $0x2a] sm:$0x3]
        %v314 = vld [vmem:[%s215 + $0x2c] sm:$0x3]
        %v315 = vld [vmem:[%s215 + $0x2e] sm:$0x1]
        %v316 = vld [vmem:[%s215 + $0x30] sm:$0x3]
        %v317 = vld [vmem:[%s215 + $0x32] sm:$0x3]
        %v318 = vld [vmem:[%s215 + $0x34] sm:$0x3]
        %v319 = vld [vmem:[%s215 + $0x36] sm:$0x1]
        %v320 = vld [vmem:[%s215 + $0x38] sm:$0x3]
        %v321 = vld [vmem:[%s215 + $0x3a] sm:$0x3]
        %v322 = vld [vmem:[%s215 + $0x3c] sm:$0x3]
        %v323 = vld [vmem:[%s215 + $0x3e] sm:$0x1]
        %v324 = vunpack.c.l.s8.bf16 %v292
        %v325 = vunpack.c.l.s8.bf16 %v293
        %v326 = vunpack.c.l.s8.bf16 %v294
        %v327 = vunpack.c.l.s8.bf16 %v295
        %v328 = vunpack.c.l.s8.bf16 %v296
        %v329 = vunpack.c.l.s8.bf16 %v297
        %v330 = vunpack.c.l.s8.bf16 %v298
        %v331 = vunpack.c.l.s8.bf16 %v299
        %v332 = vunpack.c.l.s8.bf16 %v300
        %v333 = vunpack.c.l.s8.bf16 %v301
        %v334 = vunpack.c.l.s8.bf16 %v302
        %v335 = vunpack.c.l.s8.bf16 %v303
        %v336 = vunpack.c.l.s8.bf16 %v304
        %v337 = vunpack.c.l.s8.bf16 %v305
        %v338 = vunpack.c.l.s8.bf16 %v306
        %v339 = vunpack.c.l.s8.bf16 %v307
        %v340 = vunpack.c.l.s8.bf16 %v308
        %v341 = vunpack.c.l.s8.bf16 %v309
        %v342 = vunpack.c.l.s8.bf16 %v310
        %v343 = vunpack.c.l.s8.bf16 %v311
        %v344 = vunpack.c.l.s8.bf16 %v312
        %v345 = vunpack.c.l.s8.bf16 %v313
        %v346 = vunpack.c.l.s8.bf16 %v314
        %v347 = vunpack.c.l.s8.bf16 %v315
        %v348 = vunpack.c.l.s8.bf16 %v316
        %v349 = vunpack.c.l.s8.bf16 %v317
        %v350 = vunpack.c.l.s8.bf16 %v318
        %v351 = vunpack.c.l.s8.bf16 %v319
        %v352 = vunpack.c.l.s8.bf16 %v320
        %v353 = vunpack.c.l.s8.bf16 %v321
        %v354 = vunpack.c.l.s8.bf16 %v322
        %v355 = vunpack.c.l.s8.bf16 %v323
        %v356 = vld [vmem:[%s222] sm:$0xf]
        %v357 = vld [vmem:[%s222 + $0x4] sm:$0xf]
        %v358 = vld [vmem:[%s222 + $0x8] sm:$0xf]
        %v359 = vld [vmem:[%s222 + $0xc] sm:$0xf]
        %v360 = vld [vmem:[%s222 + $0x10] sm:$0xf]
        %v361 = vld [vmem:[%s222 + $0x14] sm:$0xf]
        %v362 = vld [vmem:[%s222 + $0x18] sm:$0xf]
        %v363 = vld [vmem:[%s222 + $0x1c] sm:$0xf]
        %v364 = vld [vmem:[%s222 + $0x20] sm:$0xf]
        %v365 = vld [vmem:[%s222 + $0x24] sm:$0xf]
        %v366 = vld [vmem:[%s222 + $0x28] sm:$0xf]
        %v367 = vld [vmem:[%s222 + $0x2c] sm:$0xf]
        %v368 = vld [vmem:[%s222 + $0x30] sm:$0xf]
        %v369 = vld [vmem:[%s222 + $0x34] sm:$0xf]
        %v370 = vld [vmem:[%s222 + $0x38] sm:$0xf]
        %v371 = vld [vmem:[%s222 + $0x3c] sm:$0xf]
        %v372 = vld [vmem:[%s222 + $0x40] sm:$0xf]
        %v373 = vld [vmem:[%s222 + $0x44] sm:$0xf]
        %v374 = vld [vmem:[%s222 + $0x48] sm:$0xf]
        %v375 = vld [vmem:[%s222 + $0x4c] sm:$0xf]
        %v376 = vld [vmem:[%s222 + $0x50] sm:$0xf]
        %v377 = vld [vmem:[%s222 + $0x54] sm:$0xf]
        %v378 = vld [vmem:[%s222 + $0x58] sm:$0xf]
        %v379 = vld [vmem:[%s222 + $0x5c] sm:$0xf]
        %v380 = vld [vmem:[%s222 + $0x60] sm:$0xf]
        %v381 = vld [vmem:[%s222 + $0x64] sm:$0xf]
        %v382 = vld [vmem:[%s222 + $0x68] sm:$0xf]
        %v383 = vld [vmem:[%s222 + $0x6c] sm:$0xf]
        %v384 = vld [vmem:[%s222 + $0x70] sm:$0xf]
        %v385 = vld [vmem:[%s222 + $0x74] sm:$0xf]
        %v386 = vld [vmem:[%s222 + $0x78] sm:$0xf]
        %v387 = vld [vmem:[%s222 + $0x7c] sm:$0xf]
        %v388 = vld [vmem:[%s222 + $0x80] sm:$0xf]
        %v389 = vld [vmem:[%s222 + $0x84] sm:$0xf]
        %v390 = vld [vmem:[%s222 + $0x88] sm:$0xf]
        %v391 = vld [vmem:[%s222 + $0x8c] sm:$0xf]
        %v392 = vld [vmem:[%s222 + $0x90] sm:$0xf]
        %v393 = vld [vmem:[%s222 + $0x94] sm:$0xf]
        %v394 = vld [vmem:[%s222 + $0x98] sm:$0xf]
        %v395 = vld [vmem:[%s222 + $0x9c] sm:$0xf]
        %v396 = vld [vmem:[%s222 + $0xa0] sm:$0xf]
        %v397 = vld [vmem:[%s222 + $0xa4] sm:$0xf]
        %v398 = vld [vmem:[%s222 + $0xa8] sm:$0xf]
        %v399 = vld [vmem:[%s222 + $0xac] sm:$0xf]
        %v400 = vld [vmem:[%s222 + $0xb0] sm:$0xf]
        %v401 = vld [vmem:[%s222 + $0xb4] sm:$0xf]
        %v402 = vld [vmem:[%s222 + $0xb8] sm:$0xf]
        %v403 = vld [vmem:[%s222 + $0xbc] sm:$0xf]
        %v404 = vld [vmem:[%s222 + $0xc0] sm:$0xf]
        %v405 = vld [vmem:[%s222 + $0xc4] sm:$0xf]
        %v406 = vld [vmem:[%s222 + $0xc8] sm:$0xf]
        %v407 = vld [vmem:[%s222 + $0xcc] sm:$0xf]
        %v408 = vld [vmem:[%s222 + $0xd0] sm:$0xf]
        %v409 = vld [vmem:[%s222 + $0xd4] sm:$0xf]
        %v410 = vld [vmem:[%s222 + $0xd8] sm:$0xf]
        %v411 = vld [vmem:[%s222 + $0xdc] sm:$0xf]
        %v412 = vld [vmem:[%s222 + $0xe0] sm:$0xf]
        %v413 = vld [vmem:[%s222 + $0xe4] sm:$0xf]
        %v414 = vld [vmem:[%s222 + $0xe8] sm:$0xf]
        %v415 = vld [vmem:[%s222 + $0xec] sm:$0xf]
        %v416 = vld [vmem:[%s222 + $0xf0] sm:$0xf]
        %v417 = vld [vmem:[%s222 + $0xf4] sm:$0xf]
        %v418 = vld [vmem:[%s222 + $0xf8] sm:$0xf]
        %v419 = vld [vmem:[%s222 + $0xfc] sm:$0xf]
        %v424 = vunpack.c.l.b16 %v324
        %v425 = vunpack.c.l.b16 %v325
        %v426 = vunpack.c.l.b16 %v326
        %v427 = vunpack.c.l.b16 %v327
        %v428 = vpack.c.b16 %v425, %v424
        %v429 = vpack.c.b16 %v427, %v426
        %v438 = vunpack.c.l.b16 %v356
        %v439 = vunpack.c.l.b16 %v357
        %v440 = vunpack.c.l.b16 %v358
        %v441 = vunpack.c.l.b16 %v359
        %v442 = vunpack.c.l.b16 %v360
        %v443 = vunpack.c.l.b16 %v361
        %v444 = vunpack.c.l.b16 %v362
        %v445 = vunpack.c.l.b16 %v363
        %v446 = vpack.c.b16 %v439, %v438
        %v447 = vpack.c.b16 %v441, %v440
        %v448 = vpack.c.b16 %v443, %v442
        %v449 = vpack.c.b16 %v445, %v444
        %vm450 = vcmask 228352
        %v452 = vsel %vm450, %v428, 0
        %v455 = vsel %vm450, %v429, 0
        %v458 = vsel %vm450, %v446, 0
        %v461 = vsel %vm450, %v447, 0
        %v464 = vsel %vm450, %v448, 0
        %v467 = vsel %vm450, %v449, 0
        %469 = vmatprep.subr.bf16.mxu0 0
        %470 = vmatpush1.bf16.xpose.msra.mxu0 %v458
        %471 = vmatprep.subr.bf16.mxu0 0
        %472 = vmatpush1.bf16.xpose.msra.mxu0 %v461
        %473 = vmatprep.subr.bf16.mxu0 0
        %474 = vmatpush1.bf16.xpose.msra.mxu0 %v464
        %475 = vmatprep.subr.bf16.mxu0 0
        %476 = vmatpush1.bf16.xpose.msra.mxu0 %v467
        %477 = vmatprep.subr.bf16.mxu0 0
        %478 = vmatpush1.bf16.xpose.msra.mxu0 0
        %479 = vmatprep.subr.bf16.mxu0 0
        %480 = vmatpush1.bf16.xpose.msra.mxu0 0
        %481 = vmatprep.subr.bf16.mxu0 0
        %482 = vmatpush1.bf16.xpose.msra.mxu0 0
        %483 = vmatprep.subr.bf16.mxu0 0
        %484 = vmatpush1.bf16.xpose.msra.mxu0 0
        %485 = vmatprep.subr.bf16.mxu0 0
        %486 = vmatpush1.bf16.xpose.msra.mxu0 0
        %487 = vmatprep.subr.bf16.mxu0 0
        %488 = vmatpush1.bf16.xpose.msra.mxu0 0
        %489 = vmatprep.subr.bf16.mxu0 0
        %490 = vmatpush1.bf16.xpose.msra.mxu0 0
        %491 = vmatprep.subr.bf16.mxu0 0
        %492 = vmatpush1.bf16.xpose.msra.mxu0 0
        %493 = vmatprep.subr.bf16.mxu0 0
        %494 = vmatpush1.bf16.xpose.msra.mxu0 0
        %495 = vmatprep.subr.bf16.mxu0 0
        %496 = vmatpush1.bf16.xpose.msra.mxu0 0
        %497 = vmatprep.subr.bf16.mxu0 0
        %498 = vmatpush1.bf16.xpose.msra.mxu0 0
        %499 = vmatprep.subr.bf16.mxu0 0
        %500 = vmatpush1.bf16.xpose.msra.mxu0 0
        %501 = vmatprep.mubr.bf16.mxu0 0
        %502 = vmatmul.mubr.bf16.gmra.mrb[0].mxu0 %v452
        %v503 = vpop.f32.mrb[0].mxu0
        %v504 = vadd.f32 0.0, %v503
        %v505 = vpop.f32.mrb[0].mxu0
        %v506 = vpop.f32.mrb[0].mxu0
        %v507 = vadd.f32 0.0, %v506
        %v508 = vpop.f32.mrb[0].mxu0
        %509 = vmatprep.mubr.bf16.mxu0 0
        %510 = vmatmul.mubr.bf16.gmra.mrb[0].mxu0 %v455
        %v511 = vpop.f32.mrb[0].mxu0
        %v512 = vadd.f32 0.0, %v511
        %v513 = vpop.f32.mrb[0].mxu0
        %v514 = vpop.f32.mrb[0].mxu0
        %v515 = vadd.f32 0.0, %v514
        %v516 = vpop.f32.mrb[0].mxu0
        %517 = vdwg.mxu0
        %v522 = vunpack.c.l.b16 %v328
        %v523 = vunpack.c.l.b16 %v329
        %v524 = vunpack.c.l.b16 %v330
        %v525 = vunpack.c.l.b16 %v331
        %v526 = vpack.c.b16 %v523, %v522
        %v527 = vpack.c.b16 %v525, %v524
        %v536 = vunpack.c.l.b16 %v364
        %v537 = vunpack.c.l.b16 %v365
        %v538 = vunpack.c.l.b16 %v366
        %v539 = vunpack.c.l.b16 %v367
        %v540 = vunpack.c.l.b16 %v368
        %v541 = vunpack.c.l.b16 %v369
        %v542 = vunpack.c.l.b16 %v370
        %v543 = vunpack.c.l.b16 %v371
        %v544 = vpack.c.b16 %v537, %v536
        %v545 = vpack.c.b16 %v539, %v538
        %v546 = vpack.c.b16 %v541, %v540
        %v547 = vpack.c.b16 %v543, %v542
        %v549 = vsel %vm450, %v526, 0
        %v552 = vsel %vm450, %v527, 0
        %v555 = vsel %vm450, %v544, 0
        %v558 = vsel %vm450, %v545, 0
        %v561 = vsel %vm450, %v546, 0
        %v564 = vsel %vm450, %v547, 0
        %566 = vmatprep.subr.bf16.mxu0 0
        %567 = vmatpush1.bf16.xpose.msra.mxu0 %v555
        %568 = vmatprep.subr.bf16.mxu0 0
        %569 = vmatpush1.bf16.xpose.msra.mxu0 %v558
        %570 = vmatprep.subr.bf16.mxu0 0
        %571 = vmatpush1.bf16.xpose.msra.mxu0 %v561
        %572 = vmatprep.subr.bf16.mxu0 0
        %573 = vmatpush1.bf16.xpose.msra.mxu0 %v564
        %574 = vmatprep.subr.bf16.mxu0 0
        %575 = vmatpush1.bf16.xpose.msra.mxu0 0
        %576 = vmatprep.subr.bf16.mxu0 0
        %577 = vmatpush1.bf16.xpose.msra.mxu0 0
        %578 = vmatprep.subr.bf16.mxu0 0
        %579 = vmatpush1.bf16.xpose.msra.mxu0 0
        %580 = vmatprep.subr.bf16.mxu0 0
        %581 = vmatpush1.bf16.xpose.msra.mxu0 0
        %582 = vmatprep.subr.bf16.mxu0 0
        %583 = vmatpush1.bf16.xpose.msra.mxu0 0
        %584 = vmatprep.subr.bf16.mxu0 0
        %585 = vmatpush1.bf16.xpose.msra.mxu0 0
        %586 = vmatprep.subr.bf16.mxu0 0
        %587 = vmatpush1.bf16.xpose.msra.mxu0 0
        %588 = vmatprep.subr.bf16.mxu0 0
        %589 = vmatpush1.bf16.xpose.msra.mxu0 0
        %590 = vmatprep.subr.bf16.mxu0 0
        %591 = vmatpush1.bf16.xpose.msra.mxu0 0
        %592 = vmatprep.subr.bf16.mxu0 0
        %593 = vmatpush1.bf16.xpose.msra.mxu0 0
        %594 = vmatprep.subr.bf16.mxu0 0
        %595 = vmatpush1.bf16.xpose.msra.mxu0 0
        %596 = vmatprep.subr.bf16.mxu0 0
        %597 = vmatpush1.bf16.xpose.msra.mxu0 0
        %598 = vmatprep.mubr.bf16.mxu0 0
        %599 = vmatmul.mubr.bf16.gmra.mrb[0].mxu0 %v549
        %v600 = vpop.f32.mrb[0].mxu0
        %v601 = vadd.f32 0.0, %v600
        %v602 = vpop.f32.mrb[0].mxu0
        %v603 = vpop.f32.mrb[0].mxu0
        %v604 = vadd.f32 0.0, %v603
        %v605 = vpop.f32.mrb[0].mxu0
        %606 = vmatprep.mubr.bf16.mxu0 0
        %607 = vmatmul.mubr.bf16.gmra.mrb[0].mxu0 %v552
        %v608 = vpop.f32.mrb[0].mxu0
        %v609 = vadd.f32 0.0, %v608
        %v610 = vpop.f32.mrb[0].mxu0
        %v611 = vpop.f32.mrb[0].mxu0
        %v612 = vadd.f32 0.0, %v611
        %v613 = vpop.f32.mrb[0].mxu0
        %614 = vdwg.mxu0
        %v619 = vunpack.c.l.b16 %v332
        %v620 = vunpack.c.l.b16 %v333
        %v621 = vunpack.c.l.b16 %v334
        %v622 = vunpack.c.l.b16 %v335
        %v623 = vpack.c.b16 %v620, %v619
        %v624 = vpack.c.b16 %v622, %v621
        %v633 = vunpack.c.l.b16 %v372
        %v634 = vunpack.c.l.b16 %v373
        %v635 = vunpack.c.l.b16 %v374
        %v636 = vunpack.c.l.b16 %v375
        %v637 = vunpack.c.l.b16 %v376
        %v638 = vunpack.c.l.b16 %v377
        %v639 = vunpack.c.l.b16 %v378
        %v640 = vunpack.c.l.b16 %v379
        %v641 = vpack.c.b16 %v634, %v633
        %v642 = vpack.c.b16 %v636, %v635
        %v643 = vpack.c.b16 %v638, %v637
        %v644 = vpack.c.b16 %v640, %v639
        %v646 = vsel %vm450, %v623, 0
        %v649 = vsel %vm450, %v624, 0
        %v652 = vsel %vm450, %v641, 0
        %v655 = vsel %vm450, %v642, 0
        %v658 = vsel %vm450, %v643, 0
        %v661 = vsel %vm450, %v644, 0
        %663 = vmatprep.subr.bf16.mxu0 0
        %664 = vmatpush1.bf16.xpose.msra.mxu0 %v652
        %665 = vmatprep.subr.bf16.mxu0 0
        %666 = vmatpush1.bf16.xpose.msra.mxu0 %v655
        %667 = vmatprep.subr.bf16.mxu0 0
        %668 = vmatpush1.bf16.xpose.msra.mxu0 %v658
        %669 = vmatprep.subr.bf16.mxu0 0
        %670 = vmatpush1.bf16.xpose.msra.mxu0 %v661
        %671 = vmatprep.subr.bf16.mxu0 0
        %672 = vmatpush1.bf16.xpose.msra.mxu0 0
        %673 = vmatprep.subr.bf16.mxu0 0
        %674 = vmatpush1.bf16.xpose.msra.mxu0 0
        %675 = vmatprep.subr.bf16.mxu0 0
        %676 = vmatpush1.bf16.xpose.msra.mxu0 0
        %677 = vmatprep.subr.bf16.mxu0 0
        %678 = vmatpush1.bf16.xpose.msra.mxu0 0
        %679 = vmatprep.subr.bf16.mxu0 0
        %680 = vmatpush1.bf16.xpose.msra.mxu0 0
        %681 = vmatprep.subr.bf16.mxu0 0
        %682 = vmatpush1.bf16.xpose.msra.mxu0 0
        %683 = vmatprep.subr.bf16.mxu0 0
        %684 = vmatpush1.bf16.xpose.msra.mxu0 0
        %685 = vmatprep.subr.bf16.mxu0 0
        %686 = vmatpush1.bf16.xpose.msra.mxu0 0
        %687 = vmatprep.subr.bf16.mxu0 0
        %688 = vmatpush1.bf16.xpose.msra.mxu0 0
        %689 = vmatprep.subr.bf16.mxu0 0
        %690 = vmatpush1.bf16.xpose.msra.mxu0 0
        %691 = vmatprep.subr.bf16.mxu0 0
        %692 = vmatpush1.bf16.xpose.msra.mxu0 0
        %693 = vmatprep.subr.bf16.mxu0 0
        %694 = vmatpush1.bf16.xpose.msra.mxu0 0
        %695 = vmatprep.mubr.bf16.mxu0 0
        %696 = vmatmul.mubr.bf16.gmra.mrb[0].mxu0 %v646
        %v697 = vpop.f32.mrb[0].mxu0
        %v698 = vadd.f32 0.0, %v697
        %v699 = vpop.f32.mrb[0].mxu0
        %v700 = vpop.f32.mrb[0].mxu0
        %v701 = vadd.f32 0.0, %v700
        %v702 = vpop.f32.mrb[0].mxu0
        %703 = vmatprep.mubr.bf16.mxu0 0
        %704 = vmatmul.mubr.bf16.gmra.mrb[0].mxu0 %v649
        %v705 = vpop.f32.mrb[0].mxu0
        %v706 = vadd.f32 0.0, %v705
        %v707 = vpop.f32.mrb[0].mxu0
        %v708 = vpop.f32.mrb[0].mxu0
        %v709 = vadd.f32 0.0, %v708
        %v710 = vpop.f32.mrb[0].mxu0
        %711 = vdwg.mxu0
        %v716 = vunpack.c.l.b16 %v336
        %v717 = vunpack.c.l.b16 %v337
        %v718 = vunpack.c.l.b16 %v338
        %v719 = vunpack.c.l.b16 %v339
        %v720 = vpack.c.b16 %v717, %v716
        %v721 = vpack.c.b16 %v719, %v718
        %v730 = vunpack.c.l.b16 %v380
        %v731 = vunpack.c.l.b16 %v381
        %v732 = vunpack.c.l.b16 %v382
        %v733 = vunpack.c.l.b16 %v383
        %v734 = vunpack.c.l.b16 %v384
        %v735 = vunpack.c.l.b16 %v385
        %v736 = vunpack.c.l.b16 %v386
        %v737 = vunpack.c.l.b16 %v387
        %v738 = vpack.c.b16 %v731, %v730
        %v739 = vpack.c.b16 %v733, %v732
        %v740 = vpack.c.b16 %v735, %v734
        %v741 = vpack.c.b16 %v737, %v736
        %v743 = vsel %vm450, %v720, 0
        %v746 = vsel %vm450, %v721, 0
        %v749 = vsel %vm450, %v738, 0
        %v752 = vsel %vm450, %v739, 0
        %v755 = vsel %vm450, %v740, 0
        %v758 = vsel %vm450, %v741, 0
        %760 = vmatprep.subr.bf16.mxu0 0
        %761 = vmatpush1.bf16.xpose.msra.mxu0 %v749
        %762 = vmatprep.subr.bf16.mxu0 0
        %763 = vmatpush1.bf16.xpose.msra.mxu0 %v752
        %764 = vmatprep.subr.bf16.mxu0 0
        %765 = vmatpush1.bf16.xpose.msra.mxu0 %v755
        %766 = vmatprep.subr.bf16.mxu0 0
        %767 = vmatpush1.bf16.xpose.msra.mxu0 %v758
        %768 = vmatprep.subr.bf16.mxu0 0
        %769 = vmatpush1.bf16.xpose.msra.mxu0 0
        %770 = vmatprep.subr.bf16.mxu0 0
        %771 = vmatpush1.bf16.xpose.msra.mxu0 0
        %772 = vmatprep.subr.bf16.mxu0 0
        %773 = vmatpush1.bf16.xpose.msra.mxu0 0
        %774 = vmatprep.subr.bf16.mxu0 0
        %775 = vmatpush1.bf16.xpose.msra.mxu0 0
        %776 = vmatprep.subr.bf16.mxu0 0
        %777 = vmatpush1.bf16.xpose.msra.mxu0 0
        %778 = vmatprep.subr.bf16.mxu0 0
        %779 = vmatpush1.bf16.xpose.msra.mxu0 0
        %780 = vmatprep.subr.bf16.mxu0 0
        %781 = vmatpush1.bf16.xpose.msra.mxu0 0
        %782 = vmatprep.subr.bf16.mxu0 0
        %783 = vmatpush1.bf16.xpose.msra.mxu0 0
        %784 = vmatprep.subr.bf16.mxu0 0
        %785 = vmatpush1.bf16.xpose.msra.mxu0 0
        %786 = vmatprep.subr.bf16.mxu0 0
        %787 = vmatpush1.bf16.xpose.msra.mxu0 0
        %788 = vmatprep.subr.bf16.mxu0 0
        %789 = vmatpush1.bf16.xpose.msra.mxu0 0
        %790 = vmatprep.subr.bf16.mxu0 0
        %791 = vmatpush1.bf16.xpose.msra.mxu0 0
        %792 = vmatprep.mubr.bf16.mxu0 0
        %793 = vmatmul.mubr.bf16.gmra.mrb[0].mxu0 %v743
        %v794 = vpop.f32.mrb[0].mxu0
        %v795 = vadd.f32 0.0, %v794
        %v796 = vpop.f32.mrb[0].mxu0
        %v797 = vpop.f32.mrb[0].mxu0
        %v798 = vadd.f32 0.0, %v797
        %v799 = vpop.f32.mrb[0].mxu0
        %800 = vmatprep.mubr.bf16.mxu0 0
        %801 = vmatmul.mubr.bf16.gmra.mrb[0].mxu0 %v746
        %v802 = vpop.f32.mrb[0].mxu0
        %v803 = vadd.f32 0.0, %v802
        %v804 = vpop.f32.mrb[0].mxu0
        %v805 = vpop.f32.mrb[0].mxu0
        %v806 = vadd.f32 0.0, %v805
        %v807 = vpop.f32.mrb[0].mxu0
        %808 = vdwg.mxu0
        %v813 = vunpack.c.l.b16 %v340
        %v814 = vunpack.c.l.b16 %v341
        %v815 = vunpack.c.l.b16 %v342
        %v816 = vunpack.c.l.b16 %v343
        %v817 = vpack.c.b16 %v814, %v813
        %v818 = vpack.c.b16 %v816, %v815
        %v827 = vunpack.c.l.b16 %v388
        %v828 = vunpack.c.l.b16 %v389
        %v829 = vunpack.c.l.b16 %v390
        %v830 = vunpack.c.l.b16 %v391
        %v831 = vunpack.c.l.b16 %v392
        %v832 = vunpack.c.l.b16 %v393
        %v833 = vunpack.c.l.b16 %v394
        %v834 = vunpack.c.l.b16 %v395
        %v835 = vpack.c.b16 %v828, %v827
        %v836 = vpack.c.b16 %v830, %v829
        %v837 = vpack.c.b16 %v832, %v831
        %v838 = vpack.c.b16 %v834, %v833
        %v840 = vsel %vm450, %v817, 0
        %v843 = vsel %vm450, %v818, 0
        %v846 = vsel %vm450, %v835, 0
        %v849 = vsel %vm450, %v836, 0
        %v852 = vsel %vm450, %v837, 0
        %v855 = vsel %vm450, %v838, 0
        %857 = vmatprep.subr.bf16.mxu0 0
        %858 = vmatpush1.bf16.xpose.msra.mxu0 %v846
        %859 = vmatprep.subr.bf16.mxu0 0
        %860 = vmatpush1.bf16.xpose.msra.mxu0 %v849
        %861 = vmatprep.subr.bf16.mxu0 0
        %862 = vmatpush1.bf16.xpose.msra.mxu0 %v852
        %863 = vmatprep.subr.bf16.mxu0 0
        %864 = vmatpush1.bf16.xpose.msra.mxu0 %v855
        %865 = vmatprep.subr.bf16.mxu0 0
        %866 = vmatpush1.bf16.xpose.msra.mxu0 0
        %867 = vmatprep.subr.bf16.mxu0 0
        %868 = vmatpush1.bf16.xpose.msra.mxu0 0
        %869 = vmatprep.subr.bf16.mxu0 0
        %870 = vmatpush1.bf16.xpose.msra.mxu0 0
        %871 = vmatprep.subr.bf16.mxu0 0
        %872 = vmatpush1.bf16.xpose.msra.mxu0 0
        %873 = vmatprep.subr.bf16.mxu0 0
        %874 = vmatpush1.bf16.xpose.msra.mxu0 0
        %875 = vmatprep.subr.bf16.mxu0 0
        %876 = vmatpush1.bf16.xpose.msra.mxu0 0
        %877 = vmatprep.subr.bf16.mxu0 0
        %878 = vmatpush1.bf16.xpose.msra.mxu0 0
        %879 = vmatprep.subr.bf16.mxu0 0
        %880 = vmatpush1.bf16.xpose.msra.mxu0 0
        %881 = vmatprep.subr.bf16.mxu0 0
        %882 = vmatpush1.bf16.xpose.msra.mxu0 0
        %883 = vmatprep.subr.bf16.mxu0 0
        %884 = vmatpush1.bf16.xpose.msra.mxu0 0
        %885 = vmatprep.subr.bf16.mxu0 0
        %886 = vmatpush1.bf16.xpose.msra.mxu0 0
        %887 = vmatprep.subr.bf16.mxu0 0
        %888 = vmatpush1.bf16.xpose.msra.mxu0 0
        %889 = vmatprep.mubr.bf16.mxu0 0
        %890 = vmatmul.mubr.bf16.gmra.mrb[0].mxu0 %v840
        %v891 = vpop.f32.mrb[0].mxu0
        %v892 = vadd.f32 0.0, %v891
        %v893 = vpop.f32.mrb[0].mxu0
        %v894 = vpop.f32.mrb[0].mxu0
        %v895 = vadd.f32 0.0, %v894
        %v896 = vpop.f32.mrb[0].mxu0
        %897 = vmatprep.mubr.bf16.mxu0 0
        %898 = vmatmul.mubr.bf16.gmra.mrb[0].mxu0 %v843
        %v899 = vpop.f32.mrb[0].mxu0
        %v900 = vadd.f32 0.0, %v899
        %v901 = vpop.f32.mrb[0].mxu0
        %v902 = vpop.f32.mrb[0].mxu0
        %v903 = vadd.f32 0.0, %v902
        %v904 = vpop.f32.mrb[0].mxu0
        %905 = vdwg.mxu0
        %v910 = vunpack.c.l.b16 %v344
        %v911 = vunpack.c.l.b16 %v345
        %v912 = vunpack.c.l.b16 %v346
        %v913 = vunpack.c.l.b16 %v347
        %v914 = vpack.c.b16 %v911, %v910
        %v915 = vpack.c.b16 %v913, %v912
        %v924 = vunpack.c.l.b16 %v396
        %v925 = vunpack.c.l.b16 %v397
        %v926 = vunpack.c.l.b16 %v398
        %v927 = vunpack.c.l.b16 %v399
        %v928 = vunpack.c.l.b16 %v400
        %v929 = vunpack.c.l.b16 %v401
        %v930 = vunpack.c.l.b16 %v402
        %v931 = vunpack.c.l.b16 %v403
        %v932 = vpack.c.b16 %v925, %v924
        %v933 = vpack.c.b16 %v927, %v926
        %v934 = vpack.c.b16 %v929, %v928
        %v935 = vpack.c.b16 %v931, %v930
        %v937 = vsel %vm450, %v914, 0
        %v940 = vsel %vm450, %v915, 0
        %v943 = vsel %vm450, %v932, 0
        %v946 = vsel %vm450, %v933, 0
        %v949 = vsel %vm450, %v934, 0
        %v952 = vsel %vm450, %v935, 0
        %954 = vmatprep.subr.bf16.mxu0 0
        %955 = vmatpush1.bf16.xpose.msra.mxu0 %v943
        %956 = vmatprep.subr.bf16.mxu0 0
        %957 = vmatpush1.bf16.xpose.msra.mxu0 %v946
        %958 = vmatprep.subr.bf16.mxu0 0
        %959 = vmatpush1.bf16.xpose.msra.mxu0 %v949
        %960 = vmatprep.subr.bf16.mxu0 0
        %961 = vmatpush1.bf16.xpose.msra.mxu0 %v952
        %962 = vmatprep.subr.bf16.mxu0 0
        %963 = vmatpush1.bf16.xpose.msra.mxu0 0
        %964 = vmatprep.subr.bf16.mxu0 0
        %965 = vmatpush1.bf16.xpose.msra.mxu0 0
        %966 = vmatprep.subr.bf16.mxu0 0
        %967 = vmatpush1.bf16.xpose.msra.mxu0 0
        %968 = vmatprep.subr.bf16.mxu0 0
        %969 = vmatpush1.bf16.xpose.msra.mxu0 0
        %970 = vmatprep.subr.bf16.mxu0 0
        %971 = vmatpush1.bf16.xpose.msra.mxu0 0
        %972 = vmatprep.subr.bf16.mxu0 0
        %973 = vmatpush1.bf16.xpose.msra.mxu0 0
        %974 = vmatprep.subr.bf16.mxu0 0
        %975 = vmatpush1.bf16.xpose.msra.mxu0 0
        %976 = vmatprep.subr.bf16.mxu0 0
        %977 = vmatpush1.bf16.xpose.msra.mxu0 0
        %978 = vmatprep.subr.bf16.mxu0 0
        %979 = vmatpush1.bf16.xpose.msra.mxu0 0
        %980 = vmatprep.subr.bf16.mxu0 0
        %981 = vmatpush1.bf16.xpose.msra.mxu0 0
        %982 = vmatprep.subr.bf16.mxu0 0
        %983 = vmatpush1.bf16.xpose.msra.mxu0 0
        %984 = vmatprep.subr.bf16.mxu0 0
        %985 = vmatpush1.bf16.xpose.msra.mxu0 0
        %986 = vmatprep.mubr.bf16.mxu0 0
        %987 = vmatmul.mubr.bf16.gmra.mrb[0].mxu0 %v937
        %v988 = vpop.f32.mrb[0].mxu0
        %v989 = vadd.f32 0.0, %v988
        %v990 = vpop.f32.mrb[0].mxu0
        %v991 = vpop.f32.mrb[0].mxu0
        %v992 = vadd.f32 0.0, %v991
        %v993 = vpop.f32.mrb[0].mxu0
        %994 = vmatprep.mubr.bf16.mxu0 0
        %995 = vmatmul.mubr.bf16.gmra.mrb[0].mxu0 %v940
        %v996 = vpop.f32.mrb[0].mxu0
        %v997 = vadd.f32 0.0, %v996
        %v998 = vpop.f32.mrb[0].mxu0
        %v999 = vpop.f32.mrb[0].mxu0
        %v1000 = vadd.f32 0.0, %v999
        %v1001 = vpop.f32.mrb[0].mxu0
        %1002 = vdwg.mxu0
        %v1007 = vunpack.c.l.b16 %v348
        %v1008 = vunpack.c.l.b16 %v349
        %v1009 = vunpack.c.l.b16 %v350
        %v1010 = vunpack.c.l.b16 %v351
        %v1011 = vpack.c.b16 %v1008, %v1007
        %v1012 = vpack.c.b16 %v1010, %v1009
        %v1021 = vunpack.c.l.b16 %v404
        %v1022 = vunpack.c.l.b16 %v405
        %v1023 = vunpack.c.l.b16 %v406
        %v1024 = vunpack.c.l.b16 %v407
        %v1025 = vunpack.c.l.b16 %v408
        %v1026 = vunpack.c.l.b16 %v409
        %v1027 = vunpack.c.l.b16 %v410
        %v1028 = vunpack.c.l.b16 %v411
        %v1029 = vpack.c.b16 %v1022, %v1021
        %v1030 = vpack.c.b16 %v1024, %v1023
        %v1031 = vpack.c.b16 %v1026, %v1025
        %v1032 = vpack.c.b16 %v1028, %v1027
        %v1034 = vsel %vm450, %v1011, 0
        %v1037 = vsel %vm450, %v1012, 0
        %v1040 = vsel %vm450, %v1029, 0
        %v1043 = vsel %vm450, %v1030, 0
        %v1046 = vsel %vm450, %v1031, 0
        %v1049 = vsel %vm450, %v1032, 0
        %1051 = vmatprep.subr.bf16.mxu0 0
        %1052 = vmatpush1.bf16.xpose.msra.mxu0 %v1040
        %1053 = vmatprep.subr.bf16.mxu0 0
        %1054 = vmatpush1.bf16.xpose.msra.mxu0 %v1043
        %1055 = vmatprep.subr.bf16.mxu0 0
        %1056 = vmatpush1.bf16.xpose.msra.mxu0 %v1046
        %1057 = vmatprep.subr.bf16.mxu0 0
        %1058 = vmatpush1.bf16.xpose.msra.mxu0 %v1049
        %1059 = vmatprep.subr.bf16.mxu0 0
        %1060 = vmatpush1.bf16.xpose.msra.mxu0 0
        %1061 = vmatprep.subr.bf16.mxu0 0
        %1062 = vmatpush1.bf16.xpose.msra.mxu0 0
        %1063 = vmatprep.subr.bf16.mxu0 0
        %1064 = vmatpush1.bf16.xpose.msra.mxu0 0
        %1065 = vmatprep.subr.bf16.mxu0 0
        %1066 = vmatpush1.bf16.xpose.msra.mxu0 0
        %1067 = vmatprep.subr.bf16.mxu0 0
        %1068 = vmatpush1.bf16.xpose.msra.mxu0 0
        %1069 = vmatprep.subr.bf16.mxu0 0
        %1070 = vmatpush1.bf16.xpose.msra.mxu0 0
        %1071 = vmatprep.subr.bf16.mxu0 0
        %1072 = vmatpush1.bf16.xpose.msra.mxu0 0
        %1073 = vmatprep.subr.bf16.mxu0 0
        %1074 = vmatpush1.bf16.xpose.msra.mxu0 0
        %1075 = vmatprep.subr.bf16.mxu0 0
        %1076 = vmatpush1.bf16.xpose.msra.mxu0 0
        %1077 = vmatprep.subr.bf16.mxu0 0
        %1078 = vmatpush1.bf16.xpose.msra.mxu0 0
        %1079 = vmatprep.subr.bf16.mxu0 0
        %1080 = vmatpush1.bf16.xpose.msra.mxu0 0
        %1081 = vmatprep.subr.bf16.mxu0 0
        %1082 = vmatpush1.bf16.xpose.msra.mxu0 0
        %1083 = vmatprep.mubr.bf16.mxu0 0
        %1084 = vmatmul.mubr.bf16.gmra.mrb[0].mxu0 %v1034
        %v1085 = vpop.f32.mrb[0].mxu0
        %v1086 = vadd.f32 0.0, %v1085
        %v1087 = vpop.f32.mrb[0].mxu0
        %v1088 = vpop.f32.mrb[0].mxu0
        %v1089 = vadd.f32 0.0, %v1088
        %v1090 = vpop.f32.mrb[0].mxu0
        %1091 = vmatprep.mubr.bf16.mxu0 0
        %1092 = vmatmul.mubr.bf16.gmra.mrb[0].mxu0 %v1037
        %v1093 = vpop.f32.mrb[0].mxu0
        %v1094 = vadd.f32 0.0, %v1093
        %v1095 = vpop.f32.mrb[0].mxu0
        %v1096 = vpop.f32.mrb[0].mxu0
        %v1097 = vadd.f32 0.0, %v1096
        %v1098 = vpop.f32.mrb[0].mxu0
        %1099 = vdwg.mxu0
        %v1104 = vunpack.c.l.b16 %v352
        %v1105 = vunpack.c.l.b16 %v353
        %v1106 = vunpack.c.l.b16 %v354
        %v1107 = vunpack.c.l.b16 %v355
        %v1108 = vpack.c.b16 %v1105, %v1104
        %v1109 = vpack.c.b16 %v1107, %v1106
        %v1118 = vunpack.c.l.b16 %v412
        %v1119 = vunpack.c.l.b16 %v413
        %v1120 = vunpack.c.l.b16 %v414
        %v1121 = vunpack.c.l.b16 %v415
        %v1122 = vunpack.c.l.b16 %v416
        %v1123 = vunpack.c.l.b16 %v417
        %v1124 = vunpack.c.l.b16 %v418
        %v1125 = vunpack.c.l.b16 %v419
        %v1126 = vpack.c.b16 %v1119, %v1118
        %v1127 = vpack.c.b16 %v1121, %v1120
        %v1128 = vpack.c.b16 %v1123, %v1122
        %v1129 = vpack.c.b16 %v1125, %v1124
        %v1131 = vsel %vm450, %v1108, 0
        %v1134 = vsel %vm450, %v1109, 0
        %v1137 = vsel %vm450, %v1126, 0
        %v1140 = vsel %vm450, %v1127, 0
        %v1143 = vsel %vm450, %v1128, 0
        %v1146 = vsel %vm450, %v1129, 0
        %1148 = vmatprep.subr.bf16.mxu0 0
        %1149 = vmatpush1.bf16.xpose.msra.mxu0 %v1137
        %1150 = vmatprep.subr.bf16.mxu0 0
        %1151 = vmatpush1.bf16.xpose.msra.mxu0 %v1140
        %1152 = vmatprep.subr.bf16.mxu0 0
        %1153 = vmatpush1.bf16.xpose.msra.mxu0 %v1143
        %1154 = vmatprep.subr.bf16.mxu0 0
        %1155 = vmatpush1.bf16.xpose.msra.mxu0 %v1146
        %1156 = vmatprep.subr.bf16.mxu0 0
        %1157 = vmatpush1.bf16.xpose.msra.mxu0 0
        %1158 = vmatprep.subr.bf16.mxu0 0
        %1159 = vmatpush1.bf16.xpose.msra.mxu0 0
        %1160 = vmatprep.subr.bf16.mxu0 0
        %1161 = vmatpush1.bf16.xpose.msra.mxu0 0
        %1162 = vmatprep.subr.bf16.mxu0 0
        %1163 = vmatpush1.bf16.xpose.msra.mxu0 0
        %1164 = vmatprep.subr.bf16.mxu0 0
        %1165 = vmatpush1.bf16.xpose.msra.mxu0 0
        %1166 = vmatprep.subr.bf16.mxu0 0
        %1167 = vmatpush1.bf16.xpose.msra.mxu0 0
        %1168 = vmatprep.subr.bf16.mxu0 0
        %1169 = vmatpush1.bf16.xpose.msra.mxu0 0
        %1170 = vmatprep.subr.bf16.mxu0 0
        %1171 = vmatpush1.bf16.xpose.msra.mxu0 0
        %1172 = vmatprep.subr.bf16.mxu0 0
        %1173 = vmatpush1.bf16.xpose.msra.mxu0 0
        %1174 = vmatprep.subr.bf16.mxu0 0
        %1175 = vmatpush1.bf16.xpose.msra.mxu0 0
        %1176 = vmatprep.subr.bf16.mxu0 0
        %1177 = vmatpush1.bf16.xpose.msra.mxu0 0
        %1178 = vmatprep.subr.bf16.mxu0 0
        %1179 = vmatpush1.bf16.xpose.msra.mxu0 0
        %1180 = vmatprep.mubr.bf16.mxu0 0
        %1181 = vmatmul.mubr.bf16.gmra.mrb[0].mxu0 %v1131
        %v1182 = vpop.f32.mrb[0].mxu0
        %v1183 = vadd.f32 0.0, %v1182
        %v1184 = vpop.f32.mrb[0].mxu0
        %v1185 = vpop.f32.mrb[0].mxu0
        %v1186 = vadd.f32 0.0, %v1185
        %v1187 = vpop.f32.mrb[0].mxu0
        %1188 = vmatprep.mubr.bf16.mxu0 0
        %1189 = vmatmul.mubr.bf16.gmra.mrb[0].mxu0 %v1134
        %v1190 = vpop.f32.mrb[0].mxu0
        %v1191 = vadd.f32 0.0, %v1190
        %v1192 = vpop.f32.mrb[0].mxu0
        %v1193 = vpop.f32.mrb[0].mxu0
        %v1194 = vadd.f32 0.0, %v1193
        %v1195 = vpop.f32.mrb[0].mxu0
        %1196 = vdwg.mxu0
        %v1197 = vpack.c.bf16 %v507, %v504
        %v1198 = vpack.c.bf16 %v515, %v512
        %v1199 = vpack.c.bf16 %v604, %v601
        %v1200 = vpack.c.bf16 %v612, %v609
        %v1201 = vpack.c.bf16 %v701, %v698
        %v1202 = vpack.c.bf16 %v709, %v706
        %v1203 = vpack.c.bf16 %v798, %v795
        %v1204 = vpack.c.bf16 %v806, %v803
        %v1205 = vpack.c.bf16 %v895, %v892
        %v1206 = vpack.c.bf16 %v903, %v900
        %v1207 = vpack.c.bf16 %v992, %v989
        %v1208 = vpack.c.bf16 %v1000, %v997
        %v1209 = vpack.c.bf16 %v1089, %v1086
        %v1210 = vpack.c.bf16 %v1097, %v1094
        %v1211 = vpack.c.bf16 %v1186, %v1183
        %v1212 = vpack.c.bf16 %v1194, %v1191
        %v1221 = vunpack.c.l.b16 %v228
        %v1222 = vunpack.c.l.b16 %v229
        %v1223 = vunpack.c.l.b16 %v230
        %v1224 = vunpack.c.l.b16 %v231
        %v1225 = vunpack.c.l.b16 %v232
        %v1226 = vunpack.c.l.b16 %v233
        %v1227 = vunpack.c.l.b16 %v234
        %v1228 = vunpack.c.l.b16 %v235
        %v1229 = vpack.c.b16 %v1222, %v1221
        %v1230 = vpack.c.b16 %v1224, %v1223
        %v1231 = vpack.c.b16 %v1226, %v1225
        %v1232 = vpack.c.b16 %v1228, %v1227
        %v1234 = vsel %vm450, %v1229, 0
        %v1237 = vsel %vm450, %v1230, 0
        %v1240 = vsel %vm450, %v1231, 0
        %v1243 = vsel %vm450, %v1232, 0
        %vm1245 = vcmask 1045504
        %v1247 = vsel %vm1245, %v1198, 0
        %1249 = vmatprep.subr.bf16.mxu0 0
        %1250 = vmatpush1.bf16.msra.mxu0 %v1197
        %1251 = vmatprep.subr.bf16.mxu0 0
        %1252 = vmatpush1.bf16.msra.mxu0 %v1247
        %1253 = vmatprep.subr.bf16.mxu0 0
        %1254 = vmatpush1.bf16.msra.mxu0 0
        %1255 = vmatprep.subr.bf16.mxu0 0
        %1256 = vmatpush1.bf16.msra.mxu0 0
        %1257 = vmatprep.subr.bf16.mxu0 0
        %1258 = vmatpush1.bf16.msra.mxu0 0
        %1259 = vmatprep.subr.bf16.mxu0 0
        %1260 = vmatpush1.bf16.msra.mxu0 0
        %1261 = vmatprep.subr.bf16.mxu0 0
        %1262 = vmatpush1.bf16.msra.mxu0 0
        %1263 = vmatprep.subr.bf16.mxu0 0
        %1264 = vmatpush1.bf16.msra.mxu0 0
        %1265 = vmatprep.subr.bf16.mxu0 0
        %1266 = vmatpush1.bf16.msra.mxu0 0
        %1267 = vmatprep.subr.bf16.mxu0 0
        %1268 = vmatpush1.bf16.msra.mxu0 0
        %1269 = vmatprep.subr.bf16.mxu0 0
        %1270 = vmatpush1.bf16.msra.mxu0 0
        %1271 = vmatprep.subr.bf16.mxu0 0
        %1272 = vmatpush1.bf16.msra.mxu0 0
        %1273 = vmatprep.subr.bf16.mxu0 0
        %1274 = vmatpush1.bf16.msra.mxu0 0
        %1275 = vmatprep.subr.bf16.mxu0 0
        %1276 = vmatpush1.bf16.msra.mxu0 0
        %1277 = vmatprep.subr.bf16.mxu0 0
        %1278 = vmatpush1.bf16.msra.mxu0 0
        %1279 = vmatprep.subr.bf16.mxu0 0
        %1280 = vmatpush1.bf16.msra.mxu0 0
        %1281 = vmatprep.mubr.bf16.mxu0 0
        %1282 = vmatmul.mubr.bf16.gmra.mrb[0].mxu0 %v1234
        %v1283 = vpop.f32.mrb[0].mxu0
        %v1284 = vadd.f32 0.0, %v1283
        %v1285 = vpop.f32.mrb[0].mxu0
        %v1286 = vpop.f32.mrb[0].mxu0
        %v1287 = vadd.f32 0.0, %v1286
        %v1288 = vpop.f32.mrb[0].mxu0
        %1289 = vmatprep.mubr.bf16.mxu0 0
        %1290 = vmatmul.mubr.bf16.gmra.mrb[0].mxu0 %v1237
        %v1291 = vpop.f32.mrb[0].mxu0
        %v1292 = vadd.f32 0.0, %v1291
        %v1293 = vpop.f32.mrb[0].mxu0
        %v1294 = vpop.f32.mrb[0].mxu0
        %v1295 = vadd.f32 0.0, %v1294
        %v1296 = vpop.f32.mrb[0].mxu0
        %1297 = vmatprep.mubr.bf16.mxu0 0
        %1298 = vmatmul.mubr.bf16.gmra.mrb[0].mxu0 %v1240
        %v1299 = vpop.f32.mrb[0].mxu0
        %v1300 = vadd.f32 0.0, %v1299
        %v1301 = vpop.f32.mrb[0].mxu0
        %v1302 = vpop.f32.mrb[0].mxu0
        %v1303 = vadd.f32 0.0, %v1302
        %v1304 = vpop.f32.mrb[0].mxu0
        %1305 = vmatprep.mubr.bf16.mxu0 0
        %1306 = vmatmul.mubr.bf16.gmra.mrb[0].mxu0 %v1243
        %v1307 = vpop.f32.mrb[0].mxu0
        %v1308 = vadd.f32 0.0, %v1307
        %v1309 = vpop.f32.mrb[0].mxu0
        %v1310 = vpop.f32.mrb[0].mxu0
        %v1311 = vadd.f32 0.0, %v1310
        %v1312 = vpop.f32.mrb[0].mxu0
        %1313 = vdwg.mxu0
        %v1322 = vunpack.c.l.b16 %v236
        %v1323 = vunpack.c.l.b16 %v237
        %v1324 = vunpack.c.l.b16 %v238
        %v1325 = vunpack.c.l.b16 %v239
        %v1326 = vunpack.c.l.b16 %v240
        %v1327 = vunpack.c.l.b16 %v241
        %v1328 = vunpack.c.l.b16 %v242
        %v1329 = vunpack.c.l.b16 %v243
        %v1330 = vpack.c.b16 %v1323, %v1322
        %v1331 = vpack.c.b16 %v1325, %v1324
        %v1332 = vpack.c.b16 %v1327, %v1326
        %v1333 = vpack.c.b16 %v1329, %v1328
        %v1335 = vsel %vm450, %v1330, 0
        %v1338 = vsel %vm450, %v1331, 0
        %v1341 = vsel %vm450, %v1332, 0
        %v1344 = vsel %vm450, %v1333, 0
        %v1347 = vsel %vm1245, %v1200, 0
        %1349 = vmatprep.subr.bf16.mxu0 0
        %1350 = vmatpush1.bf16.msra.mxu0 %v1199
        %1351 = vmatprep.subr.bf16.mxu0 0
        %1352 = vmatpush1.bf16.msra.mxu0 %v1347
        %1353 = vmatprep.subr.bf16.mxu0 0
        %1354 = vmatpush1.bf16.msra.mxu0 0
        %1355 = vmatprep.subr.bf16.mxu0 0
        %1356 = vmatpush1.bf16.msra.mxu0 0
        %1357 = vmatprep.subr.bf16.mxu0 0
        %1358 = vmatpush1.bf16.msra.mxu0 0
        %1359 = vmatprep.subr.bf16.mxu0 0
        %1360 = vmatpush1.bf16.msra.mxu0 0
        %1361 = vmatprep.subr.bf16.mxu0 0
        %1362 = vmatpush1.bf16.msra.mxu0 0
        %1363 = vmatprep.subr.bf16.mxu0 0
        %1364 = vmatpush1.bf16.msra.mxu0 0
        %1365 = vmatprep.subr.bf16.mxu0 0
        %1366 = vmatpush1.bf16.msra.mxu0 0
        %1367 = vmatprep.subr.bf16.mxu0 0
        %1368 = vmatpush1.bf16.msra.mxu0 0
        %1369 = vmatprep.subr.bf16.mxu0 0
        %1370 = vmatpush1.bf16.msra.mxu0 0
        %1371 = vmatprep.subr.bf16.mxu0 0
        %1372 = vmatpush1.bf16.msra.mxu0 0
        %1373 = vmatprep.subr.bf16.mxu0 0
        %1374 = vmatpush1.bf16.msra.mxu0 0
        %1375 = vmatprep.subr.bf16.mxu0 0
        %1376 = vmatpush1.bf16.msra.mxu0 0
        %1377 = vmatprep.subr.bf16.mxu0 0
        %1378 = vmatpush1.bf16.msra.mxu0 0
        %1379 = vmatprep.subr.bf16.mxu0 0
        %1380 = vmatpush1.bf16.msra.mxu0 0
        %1381 = vmatprep.mubr.bf16.mxu0 0
        %1382 = vmatmul.mubr.bf16.gmra.mrb[0].mxu0 %v1335
        %v1383 = vpop.f32.mrb[0].mxu0
        %v1384 = vadd.f32 0.0, %v1383
        %v1385 = vpop.f32.mrb[0].mxu0
        %v1386 = vpop.f32.mrb[0].mxu0
        %v1387 = vadd.f32 0.0, %v1386
        %v1388 = vpop.f32.mrb[0].mxu0
        %1389 = vmatprep.mubr.bf16.mxu0 0
        %1390 = vmatmul.mubr.bf16.gmra.mrb[0].mxu0 %v1338
        %v1391 = vpop.f32.mrb[0].mxu0
        %v1392 = vadd.f32 0.0, %v1391
        %v1393 = vpop.f32.mrb[0].mxu0
        %v1394 = vpop.f32.mrb[0].mxu0
        %v1395 = vadd.f32 0.0, %v1394
        %v1396 = vpop.f32.mrb[0].mxu0
        %1397 = vmatprep.mubr.bf16.mxu0 0
        %1398 = vmatmul.mubr.bf16.gmra.mrb[0].mxu0 %v1341
        %v1399 = vpop.f32.mrb[0].mxu0
        %v1400 = vadd.f32 0.0, %v1399
        %v1401 = vpop.f32.mrb[0].mxu0
        %v1402 = vpop.f32.mrb[0].mxu0
        %v1403 = vadd.f32 0.0, %v1402
        %v1404 = vpop.f32.mrb[0].mxu0
        %1405 = vmatprep.mubr.bf16.mxu0 0
        %1406 = vmatmul.mubr.bf16.gmra.mrb[0].mxu0 %v1344
        %v1407 = vpop.f32.mrb[0].mxu0
        %v1408 = vadd.f32 0.0, %v1407
        %v1409 = vpop.f32.mrb[0].mxu0
        %v1410 = vpop.f32.mrb[0].mxu0
        %v1411 = vadd.f32 0.0, %v1410
        %v1412 = vpop.f32.mrb[0].mxu0
        %1413 = vdwg.mxu0
        %v1422 = vunpack.c.l.b16 %v244
        %v1423 = vunpack.c.l.b16 %v245
        %v1424 = vunpack.c.l.b16 %v246
        %v1425 = vunpack.c.l.b16 %v247
        %v1426 = vunpack.c.l.b16 %v248
        %v1427 = vunpack.c.l.b16 %v249
        %v1428 = vunpack.c.l.b16 %v250
        %v1429 = vunpack.c.l.b16 %v251
        %v1430 = vpack.c.b16 %v1423, %v1422
        %v1431 = vpack.c.b16 %v1425, %v1424
        %v1432 = vpack.c.b16 %v1427, %v1426
        %v1433 = vpack.c.b16 %v1429, %v1428
        %v1435 = vsel %vm450, %v1430, 0
        %v1438 = vsel %vm450, %v1431, 0
        %v1441 = vsel %vm450, %v1432, 0
        %v1444 = vsel %vm450, %v1433, 0
        %v1447 = vsel %vm1245, %v1202, 0
        %1449 = vmatprep.subr.bf16.mxu0 0
        %1450 = vmatpush1.bf16.msra.mxu0 %v1201
        %1451 = vmatprep.subr.bf16.mxu0 0
        %1452 = vmatpush1.bf16.msra.mxu0 %v1447
        %1453 = vmatprep.subr.bf16.mxu0 0
        %1454 = vmatpush1.bf16.msra.mxu0 0
        %1455 = vmatprep.subr.bf16.mxu0 0
        %1456 = vmatpush1.bf16.msra.mxu0 0
        %1457 = vmatprep.subr.bf16.mxu0 0
        %1458 = vmatpush1.bf16.msra.mxu0 0
        %1459 = vmatprep.subr.bf16.mxu0 0
        %1460 = vmatpush1.bf16.msra.mxu0 0
        %1461 = vmatprep.subr.bf16.mxu0 0
        %1462 = vmatpush1.bf16.msra.mxu0 0
        %1463 = vmatprep.subr.bf16.mxu0 0
        %1464 = vmatpush1.bf16.msra.mxu0 0
        %1465 = vmatprep.subr.bf16.mxu0 0
        %1466 = vmatpush1.bf16.msra.mxu0 0
        %1467 = vmatprep.subr.bf16.mxu0 0
        %1468 = vmatpush1.bf16.msra.mxu0 0
        %1469 = vmatprep.subr.bf16.mxu0 0
        %1470 = vmatpush1.bf16.msra.mxu0 0
        %1471 = vmatprep.subr.bf16.mxu0 0
        %1472 = vmatpush1.bf16.msra.mxu0 0
        %1473 = vmatprep.subr.bf16.mxu0 0
        %1474 = vmatpush1.bf16.msra.mxu0 0
        %1475 = vmatprep.subr.bf16.mxu0 0
        %1476 = vmatpush1.bf16.msra.mxu0 0
        %1477 = vmatprep.subr.bf16.mxu0 0
        %1478 = vmatpush1.bf16.msra.mxu0 0
        %1479 = vmatprep.subr.bf16.mxu0 0
        %1480 = vmatpush1.bf16.msra.mxu0 0
        %1481 = vmatprep.mubr.bf16.mxu0 0
        %1482 = vmatmul.mubr.bf16.gmra.mrb[0].mxu0 %v1435
        %v1483 = vpop.f32.mrb[0].mxu0
        %v1484 = vadd.f32 0.0, %v1483
        %v1485 = vpop.f32.mrb[0].mxu0
        %v1486 = vpop.f32.mrb[0].mxu0
        %v1487 = vadd.f32 0.0, %v1486
        %v1488 = vpop.f32.mrb[0].mxu0
        %1489 = vmatprep.mubr.bf16.mxu0 0
        %1490 = vmatmul.mubr.bf16.gmra.mrb[0].mxu0 %v1438
        %v1491 = vpop.f32.mrb[0].mxu0
        %v1492 = vadd.f32 0.0, %v1491
        %v1493 = vpop.f32.mrb[0].mxu0
        %v1494 = vpop.f32.mrb[0].mxu0
        %v1495 = vadd.f32 0.0, %v1494
        %v1496 = vpop.f32.mrb[0].mxu0
        %1497 = vmatprep.mubr.bf16.mxu0 0
        %1498 = vmatmul.mubr.bf16.gmra.mrb[0].mxu0 %v1441
        %v1499 = vpop.f32.mrb[0].mxu0
        %v1500 = vadd.f32 0.0, %v1499
        %v1501 = vpop.f32.mrb[0].mxu0
        %v1502 = vpop.f32.mrb[0].mxu0
        %v1503 = vadd.f32 0.0, %v1502
        %v1504 = vpop.f32.mrb[0].mxu0
        %1505 = vmatprep.mubr.bf16.mxu0 0
        %1506 = vmatmul.mubr.bf16.gmra.mrb[0].mxu0 %v1444
        %v1507 = vpop.f32.mrb[0].mxu0
        %v1508 = vadd.f32 0.0, %v1507
        %v1509 = vpop.f32.mrb[0].mxu0
        %v1510 = vpop.f32.mrb[0].mxu0
        %v1511 = vadd.f32 0.0, %v1510
        %v1512 = vpop.f32.mrb[0].mxu0
        %1513 = vdwg.mxu0
        %v1522 = vunpack.c.l.b16 %v252
        %v1523 = vunpack.c.l.b16 %v253
        %v1524 = vunpack.c.l.b16 %v254
        %v1525 = vunpack.c.l.b16 %v255
        %v1526 = vunpack.c.l.b16 %v256
        %v1527 = vunpack.c.l.b16 %v257
        %v1528 = vunpack.c.l.b16 %v258
        %v1529 = vunpack.c.l.b16 %v259
        %v1530 = vpack.c.b16 %v1523, %v1522
        %v1531 = vpack.c.b16 %v1525, %v1524
        %v1532 = vpack.c.b16 %v1527, %v1526
        %v1533 = vpack.c.b16 %v1529, %v1528
        %v1535 = vsel %vm450, %v1530, 0
        %v1538 = vsel %vm450, %v1531, 0
        %v1541 = vsel %vm450, %v1532, 0
        %v1544 = vsel %vm450, %v1533, 0
        %v1547 = vsel %vm1245, %v1204, 0
        %1549 = vmatprep.subr.bf16.mxu0 0
        %1550 = vmatpush1.bf16.msra.mxu0 %v1203
        %1551 = vmatprep.subr.bf16.mxu0 0
        %1552 = vmatpush1.bf16.msra.mxu0 %v1547
        %1553 = vmatprep.subr.bf16.mxu0 0
        %1554 = vmatpush1.bf16.msra.mxu0 0
        %1555 = vmatprep.subr.bf16.mxu0 0
        %1556 = vmatpush1.bf16.msra.mxu0 0
        %1557 = vmatprep.subr.bf16.mxu0 0
        %1558 = vmatpush1.bf16.msra.mxu0 0
        %1559 = vmatprep.subr.bf16.mxu0 0
        %1560 = vmatpush1.bf16.msra.mxu0 0
        %1561 = vmatprep.subr.bf16.mxu0 0
        %1562 = vmatpush1.bf16.msra.mxu0 0
        %1563 = vmatprep.subr.bf16.mxu0 0
        %1564 = vmatpush1.bf16.msra.mxu0 0
        %1565 = vmatprep.subr.bf16.mxu0 0
        %1566 = vmatpush1.bf16.msra.mxu0 0
        %1567 = vmatprep.subr.bf16.mxu0 0
        %1568 = vmatpush1.bf16.msra.mxu0 0
        %1569 = vmatprep.subr.bf16.mxu0 0
        %1570 = vmatpush1.bf16.msra.mxu0 0
        %1571 = vmatprep.subr.bf16.mxu0 0
        %1572 = vmatpush1.bf16.msra.mxu0 0
        %1573 = vmatprep.subr.bf16.mxu0 0
        %1574 = vmatpush1.bf16.msra.mxu0 0
        %1575 = vmatprep.subr.bf16.mxu0 0
        %1576 = vmatpush1.bf16.msra.mxu0 0
        %1577 = vmatprep.subr.bf16.mxu0 0
        %1578 = vmatpush1.bf16.msra.mxu0 0
        %1579 = vmatprep.subr.bf16.mxu0 0
        %1580 = vmatpush1.bf16.msra.mxu0 0
        %1581 = vmatprep.mubr.bf16.mxu0 0
        %1582 = vmatmul.mubr.bf16.gmra.mrb[0].mxu0 %v1535
        %v1583 = vpop.f32.mrb[0].mxu0
        %v1584 = vadd.f32 0.0, %v1583
        %v1585 = vpop.f32.mrb[0].mxu0
        %v1586 = vpop.f32.mrb[0].mxu0
        %v1587 = vadd.f32 0.0, %v1586
        %v1588 = vpop.f32.mrb[0].mxu0
        %1589 = vmatprep.mubr.bf16.mxu0 0
        %1590 = vmatmul.mubr.bf16.gmra.mrb[0].mxu0 %v1538
        %v1591 = vpop.f32.mrb[0].mxu0
        %v1592 = vadd.f32 0.0, %v1591
        %v1593 = vpop.f32.mrb[0].mxu0
        %v1594 = vpop.f32.mrb[0].mxu0
        %v1595 = vadd.f32 0.0, %v1594
        %v1596 = vpop.f32.mrb[0].mxu0
        %1597 = vmatprep.mubr.bf16.mxu0 0
        %1598 = vmatmul.mubr.bf16.gmra.mrb[0].mxu0 %v1541
        %v1599 = vpop.f32.mrb[0].mxu0
        %v1600 = vadd.f32 0.0, %v1599
        %v1601 = vpop.f32.mrb[0].mxu0
        %v1602 = vpop.f32.mrb[0].mxu0
        %v1603 = vadd.f32 0.0, %v1602
        %v1604 = vpop.f32.mrb[0].mxu0
        %1605 = vmatprep.mubr.bf16.mxu0 0
        %1606 = vmatmul.mubr.bf16.gmra.mrb[0].mxu0 %v1544
        %v1607 = vpop.f32.mrb[0].mxu0
        %v1608 = vadd.f32 0.0, %v1607
        %v1609 = vpop.f32.mrb[0].mxu0
        %v1610 = vpop.f32.mrb[0].mxu0
        %v1611 = vadd.f32 0.0, %v1610
        %v1612 = vpop.f32.mrb[0].mxu0
        %1613 = vdwg.mxu0
        %v1622 = vunpack.c.l.b16 %v260
        %v1623 = vunpack.c.l.b16 %v261
        %v1624 = vunpack.c.l.b16 %v262
        %v1625 = vunpack.c.l.b16 %v263
        %v1626 = vunpack.c.l.b16 %v264
        %v1627 = vunpack.c.l.b16 %v265
        %v1628 = vunpack.c.l.b16 %v266
        %v1629 = vunpack.c.l.b16 %v267
        %v1630 = vpack.c.b16 %v1623, %v1622
        %v1631 = vpack.c.b16 %v1625, %v1624
        %v1632 = vpack.c.b16 %v1627, %v1626
        %v1633 = vpack.c.b16 %v1629, %v1628
        %v1635 = vsel %vm450, %v1630, 0
        %v1638 = vsel %vm450, %v1631, 0
        %v1641 = vsel %vm450, %v1632, 0
        %v1644 = vsel %vm450, %v1633, 0
        %v1647 = vsel %vm1245, %v1206, 0
        %1649 = vmatprep.subr.bf16.mxu0 0
        %1650 = vmatpush1.bf16.msra.mxu0 %v1205
        %1651 = vmatprep.subr.bf16.mxu0 0
        %1652 = vmatpush1.bf16.msra.mxu0 %v1647
        %1653 = vmatprep.subr.bf16.mxu0 0
        %1654 = vmatpush1.bf16.msra.mxu0 0
        %1655 = vmatprep.subr.bf16.mxu0 0
        %1656 = vmatpush1.bf16.msra.mxu0 0
        %1657 = vmatprep.subr.bf16.mxu0 0
        %1658 = vmatpush1.bf16.msra.mxu0 0
        %1659 = vmatprep.subr.bf16.mxu0 0
        %1660 = vmatpush1.bf16.msra.mxu0 0
        %1661 = vmatprep.subr.bf16.mxu0 0
        %1662 = vmatpush1.bf16.msra.mxu0 0
        %1663 = vmatprep.subr.bf16.mxu0 0
        %1664 = vmatpush1.bf16.msra.mxu0 0
        %1665 = vmatprep.subr.bf16.mxu0 0
        %1666 = vmatpush1.bf16.msra.mxu0 0
        %1667 = vmatprep.subr.bf16.mxu0 0
        %1668 = vmatpush1.bf16.msra.mxu0 0
        %1669 = vmatprep.subr.bf16.mxu0 0
        %1670 = vmatpush1.bf16.msra.mxu0 0
        %1671 = vmatprep.subr.bf16.mxu0 0
        %1672 = vmatpush1.bf16.msra.mxu0 0
        %1673 = vmatprep.subr.bf16.mxu0 0
        %1674 = vmatpush1.bf16.msra.mxu0 0
        %1675 = vmatprep.subr.bf16.mxu0 0
        %1676 = vmatpush1.bf16.msra.mxu0 0
        %1677 = vmatprep.subr.bf16.mxu0 0
        %1678 = vmatpush1.bf16.msra.mxu0 0
        %1679 = vmatprep.subr.bf16.mxu0 0
        %1680 = vmatpush1.bf16.msra.mxu0 0
        %1681 = vmatprep.mubr.bf16.mxu0 0
        %1682 = vmatmul.mubr.bf16.gmra.mrb[0].mxu0 %v1635
        %v1683 = vpop.f32.mrb[0].mxu0
        %v1684 = vadd.f32 0.0, %v1683
        %v1685 = vpop.f32.mrb[0].mxu0
        %v1686 = vpop.f32.mrb[0].mxu0
        %v1687 = vadd.f32 0.0, %v1686
        %v1688 = vpop.f32.mrb[0].mxu0
        %1689 = vmatprep.mubr.bf16.mxu0 0
        %1690 = vmatmul.mubr.bf16.gmra.mrb[0].mxu0 %v1638
        %v1691 = vpop.f32.mrb[0].mxu0
        %v1692 = vadd.f32 0.0, %v1691
        %v1693 = vpop.f32.mrb[0].mxu0
        %v1694 = vpop.f32.mrb[0].mxu0
        %v1695 = vadd.f32 0.0, %v1694
        %v1696 = vpop.f32.mrb[0].mxu0
        %1697 = vmatprep.mubr.bf16.mxu0 0
        %1698 = vmatmul.mubr.bf16.gmra.mrb[0].mxu0 %v1641
        %v1699 = vpop.f32.mrb[0].mxu0
        %v1700 = vadd.f32 0.0, %v1699
        %v1701 = vpop.f32.mrb[0].mxu0
        %v1702 = vpop.f32.mrb[0].mxu0
        %v1703 = vadd.f32 0.0, %v1702
        %v1704 = vpop.f32.mrb[0].mxu0
        %1705 = vmatprep.mubr.bf16.mxu0 0
        %1706 = vmatmul.mubr.bf16.gmra.mrb[0].mxu0 %v1644
        %v1707 = vpop.f32.mrb[0].mxu0
        %v1708 = vadd.f32 0.0, %v1707
        %v1709 = vpop.f32.mrb[0].mxu0
        %v1710 = vpop.f32.mrb[0].mxu0
        %v1711 = vadd.f32 0.0, %v1710
        %v1712 = vpop.f32.mrb[0].mxu0
        %1713 = vdwg.mxu0
        %v1722 = vunpack.c.l.b16 %v268
        %v1723 = vunpack.c.l.b16 %v269
        %v1724 = vunpack.c.l.b16 %v270
        %v1725 = vunpack.c.l.b16 %v271
        %v1726 = vunpack.c.l.b16 %v272
        %v1727 = vunpack.c.l.b16 %v273
        %v1728 = vunpack.c.l.b16 %v274
        %v1729 = vunpack.c.l.b16 %v275
        %v1730 = vpack.c.b16 %v1723, %v1722
        %v1731 = vpack.c.b16 %v1725, %v1724
        %v1732 = vpack.c.b16 %v1727, %v1726
        %v1733 = vpack.c.b16 %v1729, %v1728
        %v1735 = vsel %vm450, %v1730, 0
        %v1738 = vsel %vm450, %v1731, 0
        %v1741 = vsel %vm450, %v1732, 0
        %v1744 = vsel %vm450, %v1733, 0
        %v1747 = vsel %vm1245, %v1208, 0
        %1749 = vmatprep.subr.bf16.mxu0 0
        %1750 = vmatpush1.bf16.msra.mxu0 %v1207
        %1751 = vmatprep.subr.bf16.mxu0 0
        %1752 = vmatpush1.bf16.msra.mxu0 %v1747
        %1753 = vmatprep.subr.bf16.mxu0 0
        %1754 = vmatpush1.bf16.msra.mxu0 0
        %1755 = vmatprep.subr.bf16.mxu0 0
        %1756 = vmatpush1.bf16.msra.mxu0 0
        %1757 = vmatprep.subr.bf16.mxu0 0
        %1758 = vmatpush1.bf16.msra.mxu0 0
        %1759 = vmatprep.subr.bf16.mxu0 0
        %1760 = vmatpush1.bf16.msra.mxu0 0
        %1761 = vmatprep.subr.bf16.mxu0 0
        %1762 = vmatpush1.bf16.msra.mxu0 0
        %1763 = vmatprep.subr.bf16.mxu0 0
        %1764 = vmatpush1.bf16.msra.mxu0 0
        %1765 = vmatprep.subr.bf16.mxu0 0
        %1766 = vmatpush1.bf16.msra.mxu0 0
        %1767 = vmatprep.subr.bf16.mxu0 0
        %1768 = vmatpush1.bf16.msra.mxu0 0
        %1769 = vmatprep.subr.bf16.mxu0 0
        %1770 = vmatpush1.bf16.msra.mxu0 0
        %1771 = vmatprep.subr.bf16.mxu0 0
        %1772 = vmatpush1.bf16.msra.mxu0 0
        %1773 = vmatprep.subr.bf16.mxu0 0
        %1774 = vmatpush1.bf16.msra.mxu0 0
        %1775 = vmatprep.subr.bf16.mxu0 0
        %1776 = vmatpush1.bf16.msra.mxu0 0
        %1777 = vmatprep.subr.bf16.mxu0 0
        %1778 = vmatpush1.bf16.msra.mxu0 0
        %1779 = vmatprep.subr.bf16.mxu0 0
        %1780 = vmatpush1.bf16.msra.mxu0 0
        %1781 = vmatprep.mubr.bf16.mxu0 0
        %1782 = vmatmul.mubr.bf16.gmra.mrb[0].mxu0 %v1735
        %v1783 = vpop.f32.mrb[0].mxu0
        %v1784 = vadd.f32 0.0, %v1783
        %v1785 = vpop.f32.mrb[0].mxu0
        %v1786 = vpop.f32.mrb[0].mxu0
        %v1787 = vadd.f32 0.0, %v1786
        %v1788 = vpop.f32.mrb[0].mxu0
        %1789 = vmatprep.mubr.bf16.mxu0 0
        %1790 = vmatmul.mubr.bf16.gmra.mrb[0].mxu0 %v1738
        %v1791 = vpop.f32.mrb[0].mxu0
        %v1792 = vadd.f32 0.0, %v1791
        %v1793 = vpop.f32.mrb[0].mxu0
        %v1794 = vpop.f32.mrb[0].mxu0
        %v1795 = vadd.f32 0.0, %v1794
        %v1796 = vpop.f32.mrb[0].mxu0
        %1797 = vmatprep.mubr.bf16.mxu0 0
        %1798 = vmatmul.mubr.bf16.gmra.mrb[0].mxu0 %v1741
        %v1799 = vpop.f32.mrb[0].mxu0
        %v1800 = vadd.f32 0.0, %v1799
        %v1801 = vpop.f32.mrb[0].mxu0
        %v1802 = vpop.f32.mrb[0].mxu0
        %v1803 = vadd.f32 0.0, %v1802
        %v1804 = vpop.f32.mrb[0].mxu0
        %1805 = vmatprep.mubr.bf16.mxu0 0
        %1806 = vmatmul.mubr.bf16.gmra.mrb[0].mxu0 %v1744
        %v1807 = vpop.f32.mrb[0].mxu0
        %v1808 = vadd.f32 0.0, %v1807
        %v1809 = vpop.f32.mrb[0].mxu0
        %v1810 = vpop.f32.mrb[0].mxu0
        %v1811 = vadd.f32 0.0, %v1810
        %v1812 = vpop.f32.mrb[0].mxu0
        %1813 = vdwg.mxu0
        %v1822 = vunpack.c.l.b16 %v276
        %v1823 = vunpack.c.l.b16 %v277
        %v1824 = vunpack.c.l.b16 %v278
        %v1825 = vunpack.c.l.b16 %v279
        %v1826 = vunpack.c.l.b16 %v280
        %v1827 = vunpack.c.l.b16 %v281
        %v1828 = vunpack.c.l.b16 %v282
        %v1829 = vunpack.c.l.b16 %v283
        %v1830 = vpack.c.b16 %v1823, %v1822
        %v1831 = vpack.c.b16 %v1825, %v1824
        %v1832 = vpack.c.b16 %v1827, %v1826
        %v1833 = vpack.c.b16 %v1829, %v1828
        %v1835 = vsel %vm450, %v1830, 0
        %v1838 = vsel %vm450, %v1831, 0
        %v1841 = vsel %vm450, %v1832, 0
        %v1844 = vsel %vm450, %v1833, 0
        %v1847 = vsel %vm1245, %v1210, 0
        %1849 = vmatprep.subr.bf16.mxu0 0
        %1850 = vmatpush1.bf16.msra.mxu0 %v1209
        %1851 = vmatprep.subr.bf16.mxu0 0
        %1852 = vmatpush1.bf16.msra.mxu0 %v1847
        %1853 = vmatprep.subr.bf16.mxu0 0
        %1854 = vmatpush1.bf16.msra.mxu0 0
        %1855 = vmatprep.subr.bf16.mxu0 0
        %1856 = vmatpush1.bf16.msra.mxu0 0
        %1857 = vmatprep.subr.bf16.mxu0 0
        %1858 = vmatpush1.bf16.msra.mxu0 0
        %1859 = vmatprep.subr.bf16.mxu0 0
        %1860 = vmatpush1.bf16.msra.mxu0 0
        %1861 = vmatprep.subr.bf16.mxu0 0
        %1862 = vmatpush1.bf16.msra.mxu0 0
        %1863 = vmatprep.subr.bf16.mxu0 0
        %1864 = vmatpush1.bf16.msra.mxu0 0
        %1865 = vmatprep.subr.bf16.mxu0 0
        %1866 = vmatpush1.bf16.msra.mxu0 0
        %1867 = vmatprep.subr.bf16.mxu0 0
        %1868 = vmatpush1.bf16.msra.mxu0 0
        %1869 = vmatprep.subr.bf16.mxu0 0
        %1870 = vmatpush1.bf16.msra.mxu0 0
        %1871 = vmatprep.subr.bf16.mxu0 0
        %1872 = vmatpush1.bf16.msra.mxu0 0
        %1873 = vmatprep.subr.bf16.mxu0 0
        %1874 = vmatpush1.bf16.msra.mxu0 0
        %1875 = vmatprep.subr.bf16.mxu0 0
        %1876 = vmatpush1.bf16.msra.mxu0 0
        %1877 = vmatprep.subr.bf16.mxu0 0
        %1878 = vmatpush1.bf16.msra.mxu0 0
        %1879 = vmatprep.subr.bf16.mxu0 0
        %1880 = vmatpush1.bf16.msra.mxu0 0
        %1881 = vmatprep.mubr.bf16.mxu0 0
        %1882 = vmatmul.mubr.bf16.gmra.mrb[0].mxu0 %v1835
        %v1883 = vpop.f32.mrb[0].mxu0
        %v1884 = vadd.f32 0.0, %v1883
        %v1885 = vpop.f32.mrb[0].mxu0
        %v1886 = vpop.f32.mrb[0].mxu0
        %v1887 = vadd.f32 0.0, %v1886
        %v1888 = vpop.f32.mrb[0].mxu0
        %1889 = vmatprep.mubr.bf16.mxu0 0
        %1890 = vmatmul.mubr.bf16.gmra.mrb[0].mxu0 %v1838
        %v1891 = vpop.f32.mrb[0].mxu0
        %v1892 = vadd.f32 0.0, %v1891
        %v1893 = vpop.f32.mrb[0].mxu0
        %v1894 = vpop.f32.mrb[0].mxu0
        %v1895 = vadd.f32 0.0, %v1894
        %v1896 = vpop.f32.mrb[0].mxu0
        %1897 = vmatprep.mubr.bf16.mxu0 0
        %1898 = vmatmul.mubr.bf16.gmra.mrb[0].mxu0 %v1841
        %v1899 = vpop.f32.mrb[0].mxu0
        %v1900 = vadd.f32 0.0, %v1899
        %v1901 = vpop.f32.mrb[0].mxu0
        %v1902 = vpop.f32.mrb[0].mxu0
        %v1903 = vadd.f32 0.0, %v1902
        %v1904 = vpop.f32.mrb[0].mxu0
        %1905 = vmatprep.mubr.bf16.mxu0 0
        %1906 = vmatmul.mubr.bf16.gmra.mrb[0].mxu0 %v1844
        %v1907 = vpop.f32.mrb[0].mxu0
        %v1908 = vadd.f32 0.0, %v1907
        %v1909 = vpop.f32.mrb[0].mxu0
        %v1910 = vpop.f32.mrb[0].mxu0
        %v1911 = vadd.f32 0.0, %v1910
        %v1912 = vpop.f32.mrb[0].mxu0
        %1913 = vdwg.mxu0
        %v1922 = vunpack.c.l.b16 %v284
        %v1923 = vunpack.c.l.b16 %v285
        %v1924 = vunpack.c.l.b16 %v286
        %v1925 = vunpack.c.l.b16 %v287
        %v1926 = vunpack.c.l.b16 %v288
        %v1927 = vunpack.c.l.b16 %v289
        %v1928 = vunpack.c.l.b16 %v290
        %v1929 = vunpack.c.l.b16 %v291
        %v1930 = vpack.c.b16 %v1923, %v1922
        %v1931 = vpack.c.b16 %v1925, %v1924
        %v1932 = vpack.c.b16 %v1927, %v1926
        %v1933 = vpack.c.b16 %v1929, %v1928
        %v1935 = vsel %vm450, %v1930, 0
        %v1938 = vsel %vm450, %v1931, 0
        %v1941 = vsel %vm450, %v1932, 0
        %v1944 = vsel %vm450, %v1933, 0
        %v1947 = vsel %vm1245, %v1212, 0
        %1949 = vmatprep.subr.bf16.mxu0 0
        %1950 = vmatpush1.bf16.msra.mxu0 %v1211
        %1951 = vmatprep.subr.bf16.mxu0 0
        %1952 = vmatpush1.bf16.msra.mxu0 %v1947
        %1953 = vmatprep.subr.bf16.mxu0 0
        %1954 = vmatpush1.bf16.msra.mxu0 0
        %1955 = vmatprep.subr.bf16.mxu0 0
        %1956 = vmatpush1.bf16.msra.mxu0 0
        %1957 = vmatprep.subr.bf16.mxu0 0
        %1958 = vmatpush1.bf16.msra.mxu0 0
        %1959 = vmatprep.subr.bf16.mxu0 0
        %1960 = vmatpush1.bf16.msra.mxu0 0
        %1961 = vmatprep.subr.bf16.mxu0 0
        %1962 = vmatpush1.bf16.msra.mxu0 0
        %1963 = vmatprep.subr.bf16.mxu0 0
        %1964 = vmatpush1.bf16.msra.mxu0 0
        %1965 = vmatprep.subr.bf16.mxu0 0
        %1966 = vmatpush1.bf16.msra.mxu0 0
        %1967 = vmatprep.subr.bf16.mxu0 0
        %1968 = vmatpush1.bf16.msra.mxu0 0
        %1969 = vmatprep.subr.bf16.mxu0 0
        %1970 = vmatpush1.bf16.msra.mxu0 0
        %1971 = vmatprep.subr.bf16.mxu0 0
        %1972 = vmatpush1.bf16.msra.mxu0 0
        %1973 = vmatprep.subr.bf16.mxu0 0
        %1974 = vmatpush1.bf16.msra.mxu0 0
        %1975 = vmatprep.subr.bf16.mxu0 0
        %1976 = vmatpush1.bf16.msra.mxu0 0
        %1977 = vmatprep.subr.bf16.mxu0 0
        %1978 = vmatpush1.bf16.msra.mxu0 0
        %1979 = vmatprep.subr.bf16.mxu0 0
        %1980 = vmatpush1.bf16.msra.mxu0 0
        %1981 = vmatprep.mubr.bf16.mxu0 0
        %1982 = vmatmul.mubr.bf16.gmra.mrb[0].mxu0 %v1935
        %v1983 = vpop.f32.mrb[0].mxu0
        %v1984 = vadd.f32 0.0, %v1983
        %v1985 = vpop.f32.mrb[0].mxu0
        %v1986 = vpop.f32.mrb[0].mxu0
        %v1987 = vadd.f32 0.0, %v1986
        %v1988 = vpop.f32.mrb[0].mxu0
        %1989 = vmatprep.mubr.bf16.mxu0 0
        %1990 = vmatmul.mubr.bf16.gmra.mrb[0].mxu0 %v1938
        %v1991 = vpop.f32.mrb[0].mxu0
        %v1992 = vadd.f32 0.0, %v1991
        %v1993 = vpop.f32.mrb[0].mxu0
        %v1994 = vpop.f32.mrb[0].mxu0
        %v1995 = vadd.f32 0.0, %v1994
        %v1996 = vpop.f32.mrb[0].mxu0
        %1997 = vmatprep.mubr.bf16.mxu0 0
        %1998 = vmatmul.mubr.bf16.gmra.mrb[0].mxu0 %v1941
        %v1999 = vpop.f32.mrb[0].mxu0
        %v2000 = vadd.f32 0.0, %v1999
        %v2001 = vpop.f32.mrb[0].mxu0
        %v2002 = vpop.f32.mrb[0].mxu0
        %v2003 = vadd.f32 0.0, %v2002
        %v2004 = vpop.f32.mrb[0].mxu0
        %2005 = vmatprep.mubr.bf16.mxu0 0
        %2006 = vmatmul.mubr.bf16.gmra.mrb[0].mxu0 %v1944
        %v2007 = vpop.f32.mrb[0].mxu0
        %v2008 = vadd.f32 0.0, %v2007
        %v2009 = vpop.f32.mrb[0].mxu0
        %v2010 = vpop.f32.mrb[0].mxu0
        %v2011 = vadd.f32 0.0, %v2010
        %v2012 = vpop.f32.mrb[0].mxu0
        %2013 = vdwg.mxu0
        %2046 = vrot.lane.b32.xlu0 %v1384, 64
        %v2047 = vpop.permute.xlu0 %2046
        %2048 = vrot.lane.b32.xlu0 %v1387, 64
        %v2049 = vpop.permute.xlu0 %2048
        %2050 = vrot.lane.b32.xlu0 %v1392, 64
        %v2051 = vpop.permute.xlu0 %2050
        %2052 = vrot.lane.b32.xlu0 %v1395, 64
        %v2053 = vpop.permute.xlu0 %2052
        %2054 = vrot.lane.b32.xlu0 %v1400, 64
        %v2055 = vpop.permute.xlu0 %2054
        %2056 = vrot.lane.b32.xlu0 %v1403, 64
        %v2057 = vpop.permute.xlu0 %2056
        %2058 = vrot.lane.b32.xlu0 %v1408, 64
        %v2059 = vpop.permute.xlu0 %2058
        %2060 = vrot.lane.b32.xlu0 %v1411, 64
        %v2061 = vpop.permute.xlu0 %2060
        %2062 = vrot.lane.b32.xlu0 %v1584, 64
        %v2063 = vpop.permute.xlu0 %2062
        %2064 = vrot.lane.b32.xlu0 %v1587, 64
        %v2065 = vpop.permute.xlu0 %2064
        %2066 = vrot.lane.b32.xlu0 %v1592, 64
        %v2067 = vpop.permute.xlu0 %2066
        %2068 = vrot.lane.b32.xlu0 %v1595, 64
        %v2069 = vpop.permute.xlu0 %2068
        %2070 = vrot.lane.b32.xlu0 %v1600, 64
        %v2071 = vpop.permute.xlu0 %2070
        %2072 = vrot.lane.b32.xlu0 %v1603, 64
        %v2073 = vpop.permute.xlu0 %2072
        %2074 = vrot.lane.b32.xlu0 %v1608, 64
        %v2075 = vpop.permute.xlu0 %2074
        %2076 = vrot.lane.b32.xlu0 %v1611, 64
        %v2077 = vpop.permute.xlu0 %2076
        %2078 = vrot.lane.b32.xlu0 %v1784, 64
        %v2079 = vpop.permute.xlu0 %2078
        %2080 = vrot.lane.b32.xlu0 %v1787, 64
        %v2081 = vpop.permute.xlu0 %2080
        %2082 = vrot.lane.b32.xlu0 %v1792, 64
        %v2083 = vpop.permute.xlu0 %2082
        %2084 = vrot.lane.b32.xlu0 %v1795, 64
        %v2085 = vpop.permute.xlu0 %2084
        %2086 = vrot.lane.b32.xlu0 %v1800, 64
        %v2087 = vpop.permute.xlu0 %2086
        %2088 = vrot.lane.b32.xlu0 %v1803, 64
        %v2089 = vpop.permute.xlu0 %2088
        %2090 = vrot.lane.b32.xlu0 %v1808, 64
        %v2091 = vpop.permute.xlu0 %2090
        %2092 = vrot.lane.b32.xlu0 %v1811, 64
        %v2093 = vpop.permute.xlu0 %2092
        %2094 = vrot.lane.b32.xlu0 %v1984, 64
        %v2095 = vpop.permute.xlu0 %2094
        %2096 = vrot.lane.b32.xlu0 %v1987, 64
        %v2097 = vpop.permute.xlu0 %2096
        %2098 = vrot.lane.b32.xlu0 %v1992, 64
        %v2099 = vpop.permute.xlu0 %2098
        %2100 = vrot.lane.b32.xlu0 %v1995, 64
        %v2101 = vpop.permute.xlu0 %2100
        %2102 = vrot.lane.b32.xlu0 %v2000, 64
        %v2103 = vpop.permute.xlu0 %2102
        %2104 = vrot.lane.b32.xlu0 %v2003, 64
        %v2105 = vpop.permute.xlu0 %2104
        %2106 = vrot.lane.b32.xlu0 %v2008, 64
        %v2107 = vpop.permute.xlu0 %2106
        %2108 = vrot.lane.b32.xlu0 %v2011, 64
        %v2109 = vpop.permute.xlu0 %2108
        %vm2142 = vcmask 523264
        %v2143 = vsel %vm2142, %v1284, %v2047
        %v2144 = vsel %vm2142, %v1287, %v2049
        %v2145 = vsel %vm2142, %v1292, %v2051
        %v2146 = vsel %vm2142, %v1295, %v2053
        %v2147 = vsel %vm2142, %v1300, %v2055
        %v2148 = vsel %vm2142, %v1303, %v2057
        %v2149 = vsel %vm2142, %v1308, %v2059
        %v2150 = vsel %vm2142, %v1311, %v2061
        %v2151 = vsel %vm2142, %v1484, %v2063
        %v2152 = vsel %vm2142, %v1487, %v2065
        %v2153 = vsel %vm2142, %v1492, %v2067
        %v2154 = vsel %vm2142, %v1495, %v2069
        %v2155 = vsel %vm2142, %v1500, %v2071
        %v2156 = vsel %vm2142, %v1503, %v2073
        %v2157 = vsel %vm2142, %v1508, %v2075
        %v2158 = vsel %vm2142, %v1511, %v2077
        %v2159 = vsel %vm2142, %v1684, %v2079
        %v2160 = vsel %vm2142, %v1687, %v2081
        %v2161 = vsel %vm2142, %v1692, %v2083
        %v2162 = vsel %vm2142, %v1695, %v2085
        %v2163 = vsel %vm2142, %v1700, %v2087
        %v2164 = vsel %vm2142, %v1703, %v2089
        %v2165 = vsel %vm2142, %v1708, %v2091
        %v2166 = vsel %vm2142, %v1711, %v2093
        %v2167 = vsel %vm2142, %v1884, %v2095
        %v2168 = vsel %vm2142, %v1887, %v2097
        %v2169 = vsel %vm2142, %v1892, %v2099
        %v2170 = vsel %vm2142, %v1895, %v2101
        %v2171 = vsel %vm2142, %v1900, %v2103
        %v2172 = vsel %vm2142, %v1903, %v2105
        %v2173 = vsel %vm2142, %v1908, %v2107
        %v2174 = vsel %vm2142, %v1911, %v2109
        %vm2175 = vcmp.ge.f32.partialorder %v2143, 0.5
        %vm2176 = vcmp.ge.f32.partialorder %v2144, 0.5
        %vm2177 = vcmp.ge.f32.partialorder %v2145, 0.5
        %vm2178 = vcmp.ge.f32.partialorder %v2146, 0.5
        %vm2179 = vcmp.ge.f32.partialorder %v2147, 0.5
        %vm2180 = vcmp.ge.f32.partialorder %v2148, 0.5
        %vm2181 = vcmp.ge.f32.partialorder %v2149, 0.5
        %vm2182 = vcmp.ge.f32.partialorder %v2150, 0.5
        %vm2183 = vcmp.ge.f32.partialorder %v2151, 0.5
        %vm2184 = vcmp.ge.f32.partialorder %v2152, 0.5
        %vm2185 = vcmp.ge.f32.partialorder %v2153, 0.5
        %vm2186 = vcmp.ge.f32.partialorder %v2154, 0.5
        %vm2187 = vcmp.ge.f32.partialorder %v2155, 0.5
        %vm2188 = vcmp.ge.f32.partialorder %v2156, 0.5
        %vm2189 = vcmp.ge.f32.partialorder %v2157, 0.5
        %vm2190 = vcmp.ge.f32.partialorder %v2158, 0.5
        %vm2191 = vcmp.ge.f32.partialorder %v2159, 0.5
        %vm2192 = vcmp.ge.f32.partialorder %v2160, 0.5
        %vm2193 = vcmp.ge.f32.partialorder %v2161, 0.5
        %vm2194 = vcmp.ge.f32.partialorder %v2162, 0.5
        %vm2195 = vcmp.ge.f32.partialorder %v2163, 0.5
        %vm2196 = vcmp.ge.f32.partialorder %v2164, 0.5
        %vm2197 = vcmp.ge.f32.partialorder %v2165, 0.5
        %vm2198 = vcmp.ge.f32.partialorder %v2166, 0.5
        %vm2199 = vcmp.ge.f32.partialorder %v2167, 0.5
        %vm2200 = vcmp.ge.f32.partialorder %v2168, 0.5
        %vm2201 = vcmp.ge.f32.partialorder %v2169, 0.5
        %vm2202 = vcmp.ge.f32.partialorder %v2170, 0.5
        %vm2203 = vcmp.ge.f32.partialorder %v2171, 0.5
        %vm2204 = vcmp.ge.f32.partialorder %v2172, 0.5
        %vm2205 = vcmp.ge.f32.partialorder %v2173, 0.5
        %vm2206 = vcmp.ge.f32.partialorder %v2174, 0.5
        %vm2207 = vmpackc.low %vm2176, %vm2175
        %vm2208 = vmpackc.low %vm2178, %vm2177
        %vm2209 = vmpackc.even %vm2208, %vm2207
        %vm2210 = vmpackc.low %vm2180, %vm2179
        %vm2211 = vmpackc.low %vm2182, %vm2181
        %vm2212 = vmpackc.even %vm2211, %vm2210
        %vm2213 = vmpackc.low %vm2184, %vm2183
        %vm2214 = vmpackc.low %vm2186, %vm2185
        %vm2215 = vmpackc.even %vm2214, %vm2213
        %vm2216 = vmpackc.low %vm2188, %vm2187
        %vm2217 = vmpackc.low %vm2190, %vm2189
        %vm2218 = vmpackc.even %vm2217, %vm2216
        %vm2219 = vmpackc.low %vm2192, %vm2191
        %vm2220 = vmpackc.low %vm2194, %vm2193
        %vm2221 = vmpackc.even %vm2220, %vm2219
        %vm2222 = vmpackc.low %vm2196, %vm2195
        %vm2223 = vmpackc.low %vm2198, %vm2197
        %vm2224 = vmpackc.even %vm2223, %vm2222
        %vm2225 = vmpackc.low %vm2200, %vm2199
        %vm2226 = vmpackc.low %vm2202, %vm2201
        %vm2227 = vmpackc.even %vm2226, %vm2225
        %vm2228 = vmpackc.low %vm2204, %vm2203
        %vm2229 = vmpackc.low %vm2206, %vm2205
        %vm2230 = vmpackc.even %vm2229, %vm2228
        %v2231 = vsel %vm2209, 16843009, 0
        %v2232 = vsel %vm2212, 16843009, 0
        %v2233 = vsel %vm2215, 16843009, 0
        %v2234 = vsel %vm2218, 16843009, 0
        %v2235 = vsel %vm2221, 16843009, 0
        %v2236 = vsel %vm2224, 16843009, 0
        %v2237 = vsel %vm2227, 16843009, 0
        %v2238 = vsel %vm2230, 16843009, 0
        %2239 = vst [vmem:[%s202] sm:$0xff] %v2231
        %2240 = vst [vmem:[%s202 + $0x8] sm:$0xff] %v2232
        %2241 = vst [vmem:[%s202 + $0x10] sm:$0xff] %v2233
        %2242 = vst [vmem:[%s202 + $0x18] sm:$0xff] %v2234
        %2243 = vst [vmem:[%s202 + $0x20] sm:$0xff] %v2235
        %2244 = vst [vmem:[%s202 + $0x28] sm:$0xff] %v2236
        %2245 = vst [vmem:[%s202 + $0x30] sm:$0xff] %v2237
        %2246 = vst [vmem:[%s202 + $0x38] sm:$0xff] %v2238
        %s2247 = sand.u32 %s103, 1
        %s2248 = scalar_lea.sflag [#allocation3], %s2247
        %s2249 = sand.u32 %s103, 1
        %s2250 = smul.addr %s2249, 64
        %s2251 = scalar_lea.vmem [#allocation2], %s2250
        // Predicated region
        $region33: #{tpu_custom_call.1} parent=31 // pred_check
          %p2252 = pneg %p113
        $region34: #{tpu_custom_call.1} parent=31 // pred_check_branch
          %2254 = sbr.rel (%p2252) target = $region36
        $region35: #{tpu_custom_call.1} parent=31 // pred_region
          %s2255 = smul.u32 4, %s17
          %s2257 = ssub.s32 1024, 1024
          %2258 = vsyncadd %s2248, %s2257
          %s2259 = smul.addr %s2255, 2
          %s2260 = smul.addr %s2259, 128
          %s2261 = scalar_lea.hbm %s3, %s2260
          %s2262 = sshll.u32 %s2251, 4
          %s2263 = int_to_ptr.vmem [resolvable:$true] %s2262
          %2268 = dma.vmem_to_hbm [thread:$0]  %s2263, 1024, %s2261, %s2248, 128, 128, 8
        $region36: #{tpu_custom_call.1} parent=31 // pred_fallthru
          _
      $region32: #{tpu_custom_call.1} parent=5 // pred_fallthru
        _
      %p2269 = scmp.le.s32.totalorder 2, %s12
      // Predicated region
      $region37: #{tpu_custom_call.1} parent=5 // pred_check
        %p2270 = pneg %p2269
      $region38: #{tpu_custom_call.1} parent=5 // pred_check_branch
        %2272 = sbr.rel (%p2270) target = $region40
      $region39: #{tpu_custom_call.1} parent=5 // pred_region
        %s2273 = ssub.s32 %s12, 2
        // Predicated region
        $region41: #{tpu_custom_call.1} parent=39 // pred_check
          %p2274 = pneg %p119
        $region42: #{tpu_custom_call.1} parent=39 // pred_check_branch
          %2276 = sbr.rel (%p2274) target = $region44
        $region43: #{tpu_custom_call.1} parent=39 // pred_region
          %s2277 = sand.u32 %s104, 1
          %s2278 = scalar_lea.sflag [#allocation3], %s2277
          %s2279 = sand.u32 %s104, 1
          %s2280 = smul.addr %s2279, 64
          %s2281 = scalar_lea.vmem [#allocation2], %s2280
          %2282 = dma.done %s2278, 1024
        $region44: #{tpu_custom_call.1} parent=39 // pred_fallthru
          _
      $region40: #{tpu_custom_call.1} parent=5 // pred_fallthru
        _
    $region6: #{tpu_custom_call.1} parent=1 // loop_footer
      %s16 = sadd.s32 1, %s12
    $region7: #{tpu_custom_call.1} parent=1 // loop_footer_branch
      %11 = sbr.rel target = $region3
    $region8: #{tpu_custom_call.1} parent=1 // loop_exit
      _
    %2283 = vsyncpa [#allocation3], 1
    %s2284 = scalar_lea.sflag [#allocation3], 1
    %2285 = vsyncpa %s2284, 1

</llo_original>
